<compile_context>
chip_gen: v6e
topology: v6e:2x2x1
jax: 0.10.0
libtpu: 0.0.40
codegen_flags: <defaults>
</compile_context>

<pallas_src>
import jax
import jax.numpy as jnp
from jax.experimental import pallas as pl
from jax.experimental.pallas import tpu as pltpu

_LANE = 128


# ----------------------------- kernel bodies ------------------------------ #

def _sweep_acc_kernel(a_ref, z_ref, b_ref, o_ref, acc_ref):
    """OUT = A @ Z + bias, f32 scratch accumulation, cast at last k (bf16 out)."""
    k = pl.program_id(1)

    @pl.when(k == 0)
    def _():
        acc_ref[...] = jnp.zeros_like(acc_ref)

    acc_ref[...] += jnp.dot(a_ref[...], z_ref[...],
                            preferred_element_type=jnp.float32)

    @pl.when(k == pl.num_programs(1) - 1)
    def _():
        o_ref[...] = (acc_ref[...] + b_ref[...]).astype(o_ref.dtype)


def _sweep_inplace_kernel(a_ref, z_ref, b_ref, o_ref):
    """OUT(f32) = A @ Z + bias, accumulating directly in the resident out tile."""
    k = pl.program_id(1)

    @pl.when(k == 0)
    def _():
        o_ref[...] = jnp.zeros_like(o_ref) + b_ref[...]   # broadcast bias init

    o_ref[...] += jnp.dot(a_ref[...], z_ref[...],
                          preferred_element_type=jnp.float32)


# ----------------------------- pallas_call wrapper ------------------------ #

def _a_sweep(a_bf16, z, bias, *, out_dtype, tm, tk):
    """Tiled  OUT = A @ Z + bias  over a zero-padded square adjacency.

    a_bf16: (n_pad, n_pad) bf16   z: (n_pad, op) bf16   bias: (1, op) f32
    """
    n_pad = a_bf16.shape[0]
    op = z.shape[1]
    row_tiles = n_pad // tm
    k_tiles = n_pad // tk

    out_itemsize = jnp.dtype(out_dtype).itemsize
    flops = 2 * n_pad * n_pad * op
    bytes_accessed = (a_bf16.size * 2                       # A streamed once
                      + row_tiles * z.size * 2              # Z re-read per row tile
                      + bias.size * 4
                      + n_pad * op * out_itemsize)

    inplace = out_dtype == jnp.float32
    kernel = _sweep_inplace_kernel if inplace else _sweep_acc_kernel
    scratch = [] if inplace else [pltpu.VMEM((tm, op), jnp.float32)]

    return pl.pallas_call(
        kernel,
        out_shape=jax.ShapeDtypeStruct((n_pad, op), out_dtype),
        grid_spec=pltpu.PrefetchScalarGridSpec(
            num_scalar_prefetch=0,
            grid=(row_tiles, k_tiles),
            in_specs=[
                # A tile: the dominant HBM stream.
                # (If a trace shows exposed DMA here, add
                #  pipeline_mode=pl.Buffered(3) on this spec only.)
                pl.BlockSpec((tm, tk), lambda i, k: (i, k)),
                # Z rows matching A's k columns (re-read once per row tile).
                pl.BlockSpec((tk, op), lambda i, k: (k, 0)),
                # Bias: resident (constant index map).
                pl.BlockSpec((1, op), lambda i, k: (0, 0)),
            ],
            out_specs=pl.BlockSpec((tm, op), lambda i, k: (i, 0)),
            scratch_shapes=scratch,
        ),
        compiler_params=pltpu.CompilerParams(
            dimension_semantics=("parallel", "arbitrary"),
        ),
        cost_estimate=pl.CostEstimate(flops=flops, transcendentals=0,
                                      bytes_accessed=bytes_accessed),
    )(a_bf16, z, bias)


# ----------------------------- helpers ------------------------------------ #

def _pad_axis(x, size, axis):
    pad = size - x.shape[axis]
    if pad == 0:
        return x
    widths = [(0, 0)] * x.ndim
    widths[axis] = (0, pad)
    return jnp.pad(x, widths)


def _pick_tiles(n, *, max_tile=512):
    """Pick (n_pad, tm, tk): multiples of 128, both dividing n_pad.

    tk is as large as possible (<= max_tile) while minimizing zero-padding of
    the adjacency; tm is the largest divisor of n_pad (<= max_tile) that still
    leaves >= 2 row tiles so the parallel grid axis can shard across v7x
    TensorCores.  (On v5e, max_tile may be raised to 1024 with an explicit
    vmem_limit_bytes if desired.)
    """
    n128 = pl.cdiv(n, 128) * 128
    cands = [t for t in (512, 384, 256, 128) if t <= max_tile]
    tk = min(cands, key=lambda t: (pl.cdiv(n128, t) * t, -t))
    n_pad = pl.cdiv(n128, tk) * tk
    divs = [t for t in range(128, max_tile + 1, 128) if n_pad % t == 0]
    multi = [t for t in divs if n_pad // t >= 2]
    tm = max(multi) if multi else max(divs)
    return n_pad, tm, tk


def build_normalized_adjacency(adj):
    """DGL GraphConv norm='both': D^{-1/2} A D^{-1/2}, degrees clamped to >= 1."""
    deg_out = jnp.maximum(jnp.sum(adj, axis=0), 1.0)   # out-degree of source nodes
    deg_in = jnp.maximum(jnp.sum(adj, axis=1), 1.0)    # in-degree of dest nodes
    # NOTE: for directed graphs verify the axis convention against DGL; the
    # symmetric test graph below makes both orientations identical.
    return adj * (deg_in ** -0.5)[:, None] * (deg_out ** -0.5)[None, :]


# ----------------------------- forward ------------------------------------ #

def label_svdd_forward(a_norm, x, w0, b0, w1, b1, wl_t, bl, *, max_tile=512):
    """Fused label_SVDD forward. Returns (feature [N, E], out [N, C])."""
    n, _ = x.shape
    h = w0.shape[1]
    e = w1.shape[1]
    c = wl_t.shape[1]

    n_pad, tm, tk = _pick_tiles(n, max_tile=max_tile)
    op = pl.cdiv(e + c, _LANE) * _LANE       # lane-dense packed (feature|logits)

    # Zero-padded bf16 adjacency: padding keeps the reduction exact; bf16 halves
    # the dominant HBM stream and doubles MXU rate (f32 accumulation in-kernel).
    a_p = _pad_axis(_pad_axis(a_norm, n_pad, 0), n_pad, 1).astype(jnp.bfloat16)
    # (On v7x, A could be cast to fp8 e4m3 instead to halve the stream again —
    #  requires accuracy validation at production N, so not enabled here.)

    # Fold every dense projection out of the A sweeps (exact in eval mode):
    #   slab = A @ (H1 @ w_big) + b_big,   H1 @ w_big = A @ XW + b0 @ w_big
    w0f, b0f = w0.astype(jnp.float32), b0.astype(jnp.float32)
    w1f, b1f = w1.astype(jnp.float32), b1.astype(jnp.float32)
    wlf, blf = wl_t.astype(jnp.float32), bl.astype(jnp.float32)

    w_big = jnp.zeros((h, op), jnp.float32)
    w_big = w_big.at[:, :e].set(w1f)
    w_big = w_big.at[:, e:e + c].set(w1f @ wlf)
    b_big = jnp.zeros((1, op), jnp.float32)
    b_big = b_big.at[:, :e].set(b1f)
    b_big = b_big.at[:, e:e + c].set(b1f @ wlf + blf)

    xw = _pad_axis(x.astype(jnp.float32) @ (w0f @ w_big), n_pad, 0)  # (n_pad, op)
    b0w = b0f @ w_big                                                # (1, op)

    # Sweep 0: H1W = A @ XW + b0w  (bf16 intermediate, never leaves the kernel
    # pipeline at hidden width — this replaces the old H1 HBM round-trip).
    h1w = _a_sweep(a_p, xw.astype(jnp.bfloat16), b0w,
                   out_dtype=jnp.bfloat16, tm=tm, tk=tk)
    # TODO(synk): training-mode dropout on H1 is not representable once W1 is
    # folded across it; eval-mode dropout is identity, so this fusion is exact.

    # Sweep 1: slab = A @ H1W + b_big  (f32, lane-dense; accumulates in o_ref).
    slab = _a_sweep(a_p, h1w, b_big, out_dtype=jnp.float32, tm=tm, tk=tk)

    feature = slab[:n, :e]
    out = slab[:n, e:e + c]
    return feature, out


# ----------------------------- test harness ------------------------------- #

if __name__ == "__main__":
    key = jax.random.PRNGKey(0)
    k_adj, k_x, k_w0, k_b0, k_w1, k_b1, k_wl, k_bl = jax.random.split(key, 8)

    # Small shapes consistent with the module defaults; N not a multiple of the
    # tile to exercise the padding + tile-selection path.
    N = 200
    INPUT_DIM = 16
    HIDDLE_DIM = 16
    EMBEDDING_DIM = 16
    NUM_CLASS = 2

    # Deterministic random graph (symmetric, with self-loops) and node features.
    rand = jax.random.uniform(k_adj, (N, N))
    adj = (rand + rand.T > 1.0).astype(jnp.float32)
    adj = jnp.maximum(adj, jnp.eye(N, dtype=jnp.float32))
    a_norm = build_normalized_adjacency(adj)

    x = jax.random.normal(k_x, (N, INPUT_DIM), dtype=jnp.float32)

    # Deterministic parameter init (shapes match GraphConv / nn.Linear).
    w0 = jax.random.normal(k_w0, (INPUT_DIM, HIDDLE_DIM), jnp.float32) * 0.1
    b0 = jax.random.normal(k_b0, (1, HIDDLE_DIM), jnp.float32) * 0.1
    w1 = jax.random.normal(k_w1, (HIDDLE_DIM, EMBEDDING_DIM), jnp.float32) * 0.1
    b1 = jax.random.normal(k_b1, (1, EMBEDDING_DIM), jnp.float32) * 0.1
    # nn.Linear stores weight as [C, E]; pass it transposed as [E, C].
    wl_t = (jax.random.normal(k_wl, (NUM_CLASS, EMBEDDING_DIM), jnp.float32) * 0.1).T
    bl = jax.random.normal(k_bl, (1, NUM_CLASS), jnp.float32) * 0.1

    feature, out = jax.jit(label_svdd_forward)(a_norm, x, w0, b0, w1, b1, wl_t, bl)
    feature = jax.block_until_ready(feature)
    out = jax.block_until_ready(out)

    assert feature.shape == (N, EMBEDDING_DIM)
    assert out.shape == (N, NUM_CLASS)

    # Strict reference mirroring the kernel's bf16 quantization points
    # (A, XW and H1W are bf16; all accumulation stays f32).
    w_big = jnp.concatenate([w1, w1 @ wl_t], axis=1)
    b_big = jnp.concatenate([b1, b1 @ wl_t + bl], axis=1)
    ab = a_norm.astype(jnp.bfloat16).astype(jnp.float32)
    xwb = (x @ (w0 @ w_big)).astype(jnp.bfloat16).astype(jnp.float32)
    h1w_ref = (ab @ xwb + b0 @ w_big).astype(jnp.bfloat16).astype(jnp.float32)
    slab_ref = ab @ h1w_ref + b_big
    feat_ref = slab_ref[:, :EMBEDDING_DIM]
    out_ref = slab_ref[:, EMBEDDING_DIM:EMBEDDING_DIM + NUM_CLASS]
    assert jnp.allclose(feature, feat_ref, atol=1e-2, rtol=1e-2), \
        float(jnp.max(jnp.abs(feature - feat_ref)))
    assert jnp.allclose(out, out_ref, atol=1e-2, rtol=1e-2), \
        float(jnp.max(jnp.abs(out - out_ref)))

    # Looser check against the full-f32 PyTorch-equivalent math.
    h1_f32 = a_norm @ (x @ w0) + b0
    h2_f32 = a_norm @ (h1_f32 @ w1) + b1
    out_f32 = h2_f32 @ wl_t + bl
    assert jnp.allclose(feature, h2_f32, atol=5e-2, rtol=5e-2), \
        float(jnp.max(jnp.abs(feature - h2_f32)))
    assert jnp.allclose(out, out_f32, atol=5e-2, rtol=5e-2), \
        float(jnp.max(jnp.abs(out - out_f32)))

    print("KERNEL_OK")
</pallas_src>

<mosaic_0001>
module attributes {stable_mosaic.version = 11 : i64} {
  func.func @_sweep_inplace_kernel(%arg0: i32, %arg1: i32, %arg2: memref<128x256xbf16, #tpu.memory_space<vmem>>, %arg3: memref<256x128xbf16, #tpu.memory_space<vmem>>, %arg4: memref<1x128xf32, #tpu.memory_space<vmem>>, %arg5: memref<128x128xf32, #tpu.memory_space<vmem>>) attributes {dimension_semantics = [#tpu.dimension_semantics<parallel>, #tpu.dimension_semantics<arbitrary>], iteration_bounds = array<i64: 2, 1>, scalar_prefetch = 0 : i64, scratch_operands = 0 : i64, tpu.core_type = #tpu.core_type<tc>, window_params = [{transform_indices = @transform_0, window_bounds = array<i64: 128, 256>}, {transform_indices = @transform_1, window_bounds = array<i64: 256, 128>}, {pipeline_mode = #tpu.pipeline_mode<synchronous>, transform_indices = @transform_2, window_bounds = array<i64: 1, 128>}, {transform_indices = @transform_3, window_bounds = array<i64: 128, 128>}]} {
    %c0_i32 = arith.constant 0 : i32
    %0 = arith.cmpi eq, %arg1, %c0_i32 : i32
    %1 = arith.extui %0 : i1 to i32
    %c0_i32_0 = arith.constant 0 : i32
    %2 = arith.cmpi ne, %1, %c0_i32_0 : i32
    scf.if %2 {
      %cst_8 = arith.constant 0.000000e+00 : f32
      %9 = vector.broadcast %cst_8 : f32 to vector<128x128xf32>
      %c0_9 = arith.constant 0 : index
      %c0_10 = arith.constant 0 : index
      %10 = vector.load %arg4[%c0_9, %c0_10] : memref<1x128xf32, #tpu.memory_space<vmem>>, vector<1x128xf32>
      %11 = vector.broadcast %10 : vector<1x128xf32> to vector<128x128xf32>
      %12 = arith.addf %9, %11 : vector<128x128xf32>
      %c0_11 = arith.constant 0 : index
      %c0_12 = arith.constant 0 : index
      %13 = vector.load %arg5[%c0_11, %c0_12] : memref<128x128xf32, #tpu.memory_space<vmem>>, vector<128x128xf32>
      tpu.vector_store %arg5[%c0_11, %c0_12], %12 {strides = array<i32>} : memref<128x128xf32, #tpu.memory_space<vmem>>, vector<128x128xf32>,
    } else {
    }
    %c0 = arith.constant 0 : index
    %c0_1 = arith.constant 0 : index
    %3 = vector.load %arg5[%c0, %c0_1] : memref<128x128xf32, #tpu.memory_space<vmem>>, vector<128x128xf32>
    %c0_2 = arith.constant 0 : index
    %c0_3 = arith.constant 0 : index
    %4 = vector.load %arg2[%c0_2, %c0_3] : memref<128x256xbf16, #tpu.memory_space<vmem>>, vector<128x256xbf16>
    %c0_4 = arith.constant 0 : index
    %c0_5 = arith.constant 0 : index
    %5 = vector.load %arg3[%c0_4, %c0_5] : memref<256x128xbf16, #tpu.memory_space<vmem>>, vector<256x128xbf16>
    %cst = arith.constant dense<0.000000e+00> : vector<128x128xf32>
    %6 = tpu.matmul %4, %5, %cst {dimension_numbers = #tpu.dot_dimension_numbers<[1], [0], [0], [1], [0, 0, 1, 1], [], []>} : vector<128x256xbf16>, vector<256x128xbf16>, vector<128x128xf32> -> vector<128x128xf32>
    %7 = arith.addf %3, %6 : vector<128x128xf32>
    %c0_6 = arith.constant 0 : index
    %c0_7 = arith.constant 0 : index
    %8 = vector.load %arg5[%c0_6, %c0_7] : memref<128x128xf32, #tpu.memory_space<vmem>>, vector<128x128xf32>
    tpu.vector_store %arg5[%c0_6, %c0_7], %7 {strides = array<i32>} : memref<128x128xf32, #tpu.memory_space<vmem>>, vector<128x128xf32>,
    return
  }
  func.func @transform_0(%arg0: i32, %arg1: i32) -> (i32, i32) {
    %c0_i32 = arith.constant 0 : i32
    return %arg0, %arg1 : i32, i32
  }
  func.func @transform_1(%arg0: i32, %arg1: i32) -> (i32, i32) {
    %c0_i32 = arith.constant 0 : i32
    %c0_i32_0 = arith.constant 0 : i32
    return %arg1, %c0_i32 : i32, i32
  }
  func.func @transform_2(%arg0: i32, %arg1: i32) -> (i32, i32) {
    %c0_i32 = arith.constant 0 : i32
    %c0_i32_0 = arith.constant 0 : i32
    %c0_i32_1 = arith.constant 0 : i32
    return %c0_i32, %c0_i32_0 : i32, i32
  }
  func.func @transform_3(%arg0: i32, %arg1: i32) -> (i32, i32) {
    %c0_i32 = arith.constant 0 : i32
    %c0_i32_0 = arith.constant 0 : i32
    return %arg0, %c0_i32 : i32, i32
  }
}

module attributes {stable_mosaic.version = 11 : i64} {
  func.func @_sweep_acc_kernel(%arg0: i32, %arg1: i32, %arg2: memref<128x256xbf16, #tpu.memory_space<vmem>>, %arg3: memref<256x128xbf16, #tpu.memory_space<vmem>>, %arg4: memref<1x128xf32, #tpu.memory_space<vmem>>, %arg5: memref<128x128xbf16, #tpu.memory_space<vmem>>, %arg6: memref<128x128xf32, #tpu.memory_space<vmem>>) attributes {dimension_semantics = [#tpu.dimension_semantics<parallel>, #tpu.dimension_semantics<arbitrary>], iteration_bounds = array<i64: 2, 1>, scalar_prefetch = 0 : i64, scratch_operands = 1 : i64, tpu.core_type = #tpu.core_type<tc>, window_params = [{transform_indices = @transform_0, window_bounds = array<i64: 128, 256>}, {transform_indices = @transform_1, window_bounds = array<i64: 256, 128>}, {pipeline_mode = #tpu.pipeline_mode<synchronous>, transform_indices = @transform_2, window_bounds = array<i64: 1, 128>}, {transform_indices = @transform_3, window_bounds = array<i64: 128, 128>}]} {
    %c0_i32 = arith.constant 0 : i32
    %0 = arith.cmpi eq, %arg1, %c0_i32 : i32
    %1 = arith.extui %0 : i1 to i32
    %c0_i32_0 = arith.constant 0 : i32
    %2 = arith.cmpi ne, %1, %c0_i32_0 : i32
    scf.if %2 {
      %cst_10 = arith.constant 0.000000e+00 : f32
      %12 = vector.broadcast %cst_10 : f32 to vector<128x128xf32>
      %c0_11 = arith.constant 0 : index
      %c0_12 = arith.constant 0 : index
      %13 = vector.load %arg6[%c0_11, %c0_12] : memref<128x128xf32, #tpu.memory_space<vmem>>, vector<128x128xf32>
      tpu.vector_store %arg6[%c0_11, %c0_12], %12 {strides = array<i32>} : memref<128x128xf32, #tpu.memory_space<vmem>>, vector<128x128xf32>,
    } else {
    }
    %c0 = arith.constant 0 : index
    %c0_1 = arith.constant 0 : index
    %3 = vector.load %arg6[%c0, %c0_1] : memref<128x128xf32, #tpu.memory_space<vmem>>, vector<128x128xf32>
    %c0_2 = arith.constant 0 : index
    %c0_3 = arith.constant 0 : index
    %4 = vector.load %arg2[%c0_2, %c0_3] : memref<128x256xbf16, #tpu.memory_space<vmem>>, vector<128x256xbf16>
    %c0_4 = arith.constant 0 : index
    %c0_5 = arith.constant 0 : index
    %5 = vector.load %arg3[%c0_4, %c0_5] : memref<256x128xbf16, #tpu.memory_space<vmem>>, vector<256x128xbf16>
    %cst = arith.constant dense<0.000000e+00> : vector<128x128xf32>
    %6 = tpu.matmul %4, %5, %cst {dimension_numbers = #tpu.dot_dimension_numbers<[1], [0], [0], [1], [0, 0, 1, 1], [], []>} : vector<128x256xbf16>, vector<256x128xbf16>, vector<128x128xf32> -> vector<128x128xf32>
    %7 = arith.addf %3, %6 : vector<128x128xf32>
    %c0_6 = arith.constant 0 : index
    %c0_7 = arith.constant 0 : index
    %8 = vector.load %arg6[%c0_6, %c0_7] : memref<128x128xf32, #tpu.memory_space<vmem>>, vector<128x128xf32>
    tpu.vector_store %arg6[%c0_6, %c0_7], %7 {strides = array<i32>} : memref<128x128xf32, #tpu.memory_space<vmem>>, vector<128x128xf32>,
    %c0_i32_8 = arith.constant 0 : i32
    %9 = arith.cmpi eq, %arg1, %c0_i32_8 : i32
    %10 = arith.extui %9 : i1 to i32
    %c0_i32_9 = arith.constant 0 : i32
    %11 = arith.cmpi ne, %10, %c0_i32_9 : i32
    scf.if %11 {
      %c0_10 = arith.constant 0 : index
      %c0_11 = arith.constant 0 : index
      %12 = vector.load %arg6[%c0_10, %c0_11] : memref<128x128xf32, #tpu.memory_space<vmem>>, vector<128x128xf32>
      %c0_12 = arith.constant 0 : index
      %c0_13 = arith.constant 0 : index
      %13 = vector.load %arg4[%c0_12, %c0_13] : memref<1x128xf32, #tpu.memory_space<vmem>>, vector<1x128xf32>
      %14 = vector.broadcast %13 : vector<1x128xf32> to vector<128x128xf32>
      %15 = arith.addf %12, %14 : vector<128x128xf32>
      %16 = arith.truncf %15 : vector<128x128xf32> to vector<128x128xbf16>
      %c0_14 = arith.constant 0 : index
      %c0_15 = arith.constant 0 : index
      %17 = vector.load %arg5[%c0_14, %c0_15] : memref<128x128xbf16, #tpu.memory_space<vmem>>, vector<128x128xbf16>
      tpu.vector_store %arg5[%c0_14, %c0_15], %16 {strides = array<i32>} : memref<128x128xbf16, #tpu.memory_space<vmem>>, vector<128x128xbf16>,
    } else {
    }
    return
  }
  func.func @transform_0(%arg0: i32, %arg1: i32) -> (i32, i32) {
    %c0_i32 = arith.constant 0 : i32
    return %arg0, %arg1 : i32, i32
  }
  func.func @transform_1(%arg0: i32, %arg1: i32) -> (i32, i32) {
    %c0_i32 = arith.constant 0 : i32
    %c0_i32_0 = arith.constant 0 : i32
    return %arg1, %c0_i32 : i32, i32
  }
  func.func @transform_2(%arg0: i32, %arg1: i32) -> (i32, i32) {
    %c0_i32 = arith.constant 0 : i32
    %c0_i32_0 = arith.constant 0 : i32
    %c0_i32_1 = arith.constant 0 : i32
    return %c0_i32, %c0_i32_0 : i32, i32
  }
  func.func @transform_3(%arg0: i32, %arg1: i32) -> (i32, i32) {
    %c0_i32 = arith.constant 0 : i32
    %c0_i32_0 = arith.constant 0 : i32
    return %arg0, %c0_i32 : i32, i32
  }
}

</mosaic_0001>

<llo_original>
// kernel: label_svdd_forward.3
$region0: #{label_svdd_forward.3}
  #allocation0 [shape = 'u32[]', space=smem, size = 0x4, offset = 0x4, fixed_abs, tag = 'smem constant byte address 0x4 - core index']
  #allocation1 [shape = 'u32[144,128]{1,0:T(1,128)}', space=vmem, size = 0x12000, scoped, tag = 'internal scratch']
  %s0 = inlined_call_operand.vmem [shape: bf16[256,256], index: 0, kind: input, shape index: {}]
  %s1 = inlined_call_operand.vmem [shape: bf16[256,128], index: 1, kind: input, shape index: {}]
  %s2 = inlined_call_operand.vmem [shape: f32[1,128], index: 2, kind: input, shape index: {}]
  %s3 = inlined_call_operand.vmem [shape: f32[256,128], index: 3, kind: output, shape index: {}]
  %s4 = sld [smem:[#allocation0]]
  $region49: #{label_svdd_forward.3} parent=0
    _
  %s6 = ssub.s32 1, %s4
  %s7 = scalar_select 0, %s6, %s4
  loop: start=0, step=1, limit=4
  $region2: #{label_svdd_forward.3} parent=0 // loop_pre_header
    _
  $region3: #{label_svdd_forward.3} parent=0 // loop_header
    %s9 = sphi 0, %s13
    %p10 = scmp.ge.s32.totalorder %s9, 4
    %s16 = sphi 0, %s28
    %s17 = sphi 0, %s24
    %s18 = sphi 0, %s16
    %s19 = sphi 0, %s17
    %s20 = sphi 0, %s18
    %s21 = sphi 0, %s19
    %s33 = sphi 0, %s35
    %s36 = sphi 0, %s33
    %s37 = sphi 0, %s36
    %s53 = sphi 0, %s37
    %s59 = sphi 0, %s61
    %s62 = sphi 0, %s59
    %s63 = sphi 0, %s62
    %s79 = sphi 0, %s63
    %s83 = sphi 0, %s83
    %s85 = sphi 0, %s83
    %s86 = sphi 0, %s85
    %s100 = sphi 0, %s86
    %s106 = sphi 0, %s108
    %s109 = sphi 0, %s106
    %s110 = sphi 0, %s109
    %s126 = sphi 0, %s110
  $region4: #{label_svdd_forward.3} parent=0 // loop_header_branch
    %12 = sbr.rel (%p10) target = $region8
  $region5: #{label_svdd_forward.3} parent=0 // loop_body
    %s14 = ssub.s32 %s9, 1
    %s15 = ssub.s32 %s9, 2
    %s22 = sadd.s32 1, %s17
    %p23 = scmp.ge.s32.totalorder %s22, 1
    %s24 = scalar_select %p23, 0, %s22
    %s25 = sadd.s32 1, %s16
    %s26 = scalar_select %p23, %s25, %s16
    %p27 = scmp.ge.s32.totalorder %s26, 2
    %s28 = scalar_select %p27, 0, %s26
    %s29 = ssub.s32 %s16, %s28
    %s30 = ssub.s32 %s17, %s24
    %s31 = sor.u32 %s29, %s30
    %p32 = scmp.eq.s32.totalorder %s31, 0
    %s34 = sadd.s32 %s33, 1
    %s35 = scalar_select %p32, %s33, %s34
    %p38 = pneg %p32
    %p39 = scmp.eq.s32.totalorder %s9, 1
    %p40 = por %p38, %p39
    %p41 = scmp.ne.s32.totalorder %s33, %s36
    %p42 = scmp.eq.s32.totalorder %s9, 0
    %p43 = por %p41, %p42
    %p44 = scmp.ne.s32.totalorder %s33, %s36
    %p45 = scmp.eq.s32.totalorder %s14, 1
    %p46 = por %p44, %p45
    %p47 = scmp.ne.s32.totalorder %s36, %s37
    %p48 = scmp.eq.s32.totalorder %s14, 0
    %p49 = por %p47, %p48
    %p50 = scmp.ne.s32.totalorder %s36, %s37
    %p51 = scmp.eq.s32.totalorder %s15, 1
    %p52 = por %p50, %p51
    %p54 = scmp.ne.s32.totalorder %s37, %s53
    %p55 = scmp.eq.s32.totalorder %s15, 0
    %p56 = por %p54, %p55
    %s57 = ssub.s32 %s17, %s24
    %p58 = scmp.eq.s32.totalorder %s57, 0
    %s60 = sadd.s32 %s59, 1
    %s61 = scalar_select %p58, %s59, %s60
    %p64 = pneg %p58
    %p65 = scmp.eq.s32.totalorder %s9, 1
    %p66 = por %p64, %p65
    %p67 = scmp.ne.s32.totalorder %s59, %s62
    %p68 = scmp.eq.s32.totalorder %s9, 0
    %p69 = por %p67, %p68
    %p70 = scmp.ne.s32.totalorder %s59, %s62
    %p71 = scmp.eq.s32.totalorder %s14, 1
    %p72 = por %p70, %p71
    %p73 = scmp.ne.s32.totalorder %s62, %s63
    %p74 = scmp.eq.s32.totalorder %s14, 0
    %p75 = por %p73, %p74
    %p76 = scmp.ne.s32.totalorder %s62, %s63
    %p77 = scmp.eq.s32.totalorder %s15, 1
    %p78 = por %p76, %p77
    %p80 = scmp.ne.s32.totalorder %s63, %s79
    %p81 = scmp.eq.s32.totalorder %s15, 0
    %p82 = por %p80, %p81
    %s84 = sadd.s32 %s83, 1
    %p87 = scmp.eq.s32.totalorder %s9, 1
    %p88 = scmp.ne.s32.totalorder %s83, %s85
    %p89 = scmp.eq.s32.totalorder %s9, 0
    %p90 = por %p88, %p89
    %p91 = scmp.ne.s32.totalorder %s83, %s85
    %p92 = scmp.eq.s32.totalorder %s14, 1
    %p93 = por %p91, %p92
    %p94 = scmp.ne.s32.totalorder %s85, %s86
    %p95 = scmp.eq.s32.totalorder %s14, 0
    %p96 = por %p94, %p95
    %p97 = scmp.ne.s32.totalorder %s85, %s86
    %p98 = scmp.eq.s32.totalorder %s15, 1
    %p99 = por %p97, %p98
    %p101 = scmp.ne.s32.totalorder %s86, %s100
    %p102 = scmp.eq.s32.totalorder %s15, 0
    %p103 = por %p101, %p102
    %s104 = ssub.s32 %s16, %s28
    %p105 = scmp.eq.s32.totalorder %s104, 0
    %s107 = sadd.s32 %s106, 1
    %s108 = scalar_select %p105, %s106, %s107
    %p111 = pneg %p105
    %p112 = scmp.eq.s32.totalorder %s9, 1
    %p113 = por %p111, %p112
    %p114 = scmp.ne.s32.totalorder %s106, %s109
    %p115 = scmp.eq.s32.totalorder %s9, 0
    %p116 = por %p114, %p115
    %p117 = scmp.ne.s32.totalorder %s106, %s109
    %p118 = scmp.eq.s32.totalorder %s14, 1
    %p119 = por %p117, %p118
    %p120 = scmp.ne.s32.totalorder %s109, %s110
    %p121 = scmp.eq.s32.totalorder %s14, 0
    %p122 = por %p120, %p121
    %p123 = scmp.ne.s32.totalorder %s109, %s110
    %p124 = scmp.eq.s32.totalorder %s15, 1
    %p125 = por %p123, %p124
    %p127 = scmp.ne.s32.totalorder %s110, %s126
    %p128 = scmp.eq.s32.totalorder %s15, 0
    %p129 = por %p127, %p128
    %p130 = scmp.le.s32.totalorder 1, %s9
    %p131 = scmp.lt.s32.totalorder %s9, 3
    %p132 = pnand %p130, %p131
    %p133 = pneg %p132
    // Predicated region
    $region9: #{label_svdd_forward.3} parent=5 // pred_check
      _
    $region10: #{label_svdd_forward.3} parent=5 // pred_check_branch
      %135 = sbr.rel (%p132) target = $region12
    $region11: #{label_svdd_forward.3} parent=5 // pred_region
      %s136 = ssub.s32 %s9, 1
      // Predicated region
      $region13: #{label_svdd_forward.3} parent=11 // pred_check
        %p137 = pneg %p75
      $region14: #{label_svdd_forward.3} parent=11 // pred_check_branch
        %139 = sbr.rel (%p137) target = $region16
      $region15: #{label_svdd_forward.3} parent=11 // pred_region
        %s140 = smul.u32 32, %s19
        %p141 = scmp.lt.s32.totalorder %s140, 31
        %s142 = scalar_select %p141, %s140, 31
        %s143 = smul.addr %s142, 4
        %s144 = scalar_lea.vmem %s1, %s143
        %s145 = smul.u32 32, %s19
      $region16: #{label_svdd_forward.3} parent=11 // pred_fallthru
        _
      // Predicated region
      $region17: #{label_svdd_forward.3} parent=11 // pred_check
        %p146 = pneg %p96
      $region18: #{label_svdd_forward.3} parent=11 // pred_check_branch
        %148 = sbr.rel (%p146) target = $region20
      $region19: #{label_svdd_forward.3} parent=11 // pred_region
        _
      $region20: #{label_svdd_forward.3} parent=11 // pred_fallthru
        _
    $region12: #{label_svdd_forward.3} parent=5 // pred_fallthru
      _
    %p149 = scmp.lt.s32.totalorder %s9, 2
    // Predicated region
    $region21: #{label_svdd_forward.3} parent=5 // pred_check
      %p150 = pneg %p149
    $region22: #{label_svdd_forward.3} parent=5 // pred_check_branch
      %152 = sbr.rel (%p150) target = $region24
    $region23: #{label_svdd_forward.3} parent=5 // pred_region
      // Predicated region
      $region25: #{label_svdd_forward.3} parent=23 // pred_check
        %p153 = pneg %p43
      $region26: #{label_svdd_forward.3} parent=23 // pred_check_branch
        %155 = sbr.rel (%p153) target = $region28
      $region27: #{label_svdd_forward.3} parent=23 // pred_region
        %s156 = smul.u32 16, %s16
        %s157 = smul.u32 2, %s17
        %p158 = scmp.lt.s32.totalorder %s156, 31
        %s159 = scalar_select %p158, %s156, 31
        %p160 = scmp.lt.s32.totalorder %s157, 1
        %s161 = scalar_select %p160, %s157, 1
        %s162 = smul.addr %s159, 2
        %s163 = sadd.s32 %s161, %s162
        %s164 = smul.addr %s163, 4
        %s165 = scalar_lea.vmem %s0, %s164
        %s166 = smul.u32 16, %s16
        %s167 = smul.u32 2, %s17
      $region28: #{label_svdd_forward.3} parent=23 // pred_fallthru
        _
    $region24: #{label_svdd_forward.3} parent=5 // pred_fallthru
      _
    %p168 = scmp.le.s32.totalorder 1, %s9
    %p169 = scmp.lt.s32.totalorder %s9, 3
    %p170 = pnand %p168, %p169
    %p171 = pneg %p170
    // Predicated region
    $region29: #{label_svdd_forward.3} parent=5 // pred_check
      _
    $region30: #{label_svdd_forward.3} parent=5 // pred_check_branch
      %173 = sbr.rel (%p170) target = $region32
    $region31: #{label_svdd_forward.3} parent=5 // pred_region
      %s174 = ssub.s32 %s9, 1
      %s175 = smul.u32 16, %s18
      %s176 = smul.u32 2, %s19
      %p177 = scmp.lt.s32.totalorder %s175, 31
      %s178 = scalar_select %p177, %s175, 31
      %p179 = scmp.lt.s32.totalorder %s176, 1
      %s180 = scalar_select %p179, %s176, 1
      %s181 = smul.addr %s178, 2
      %s182 = sadd.s32 %s180, %s181
      %s183 = smul.addr %s182, 4
      %s184 = scalar_lea.vmem %s0, %s183
      %p185 = pneg %p49
      %p186 = pneg %p46
      %s187 = smul.u32 32, %s19
      %p188 = scmp.lt.s32.totalorder %s187, 31
      %s189 = scalar_select %p188, %s187, 31
      %s190 = smul.addr %s189, 4
      %s191 = scalar_lea.vmem %s1, %s190
      %p192 = pneg %p75
      %p193 = pneg %p72
      %p194 = pneg %p96
      %p195 = pneg %p93
      %p196 = pneg %p122
      %p197 = pneg %p119
      %s198 = smul.u32 16, %s18
      %p199 = scmp.lt.s32.totalorder %s198, 31
      %s200 = scalar_select %p199, %s198, 31
      %s201 = smul.addr %s200, 8
      %s202 = scalar_lea.vmem %s3, %s201
      %s203 = smul.u32 16, %s18
      %s204 = smul.u32 2, %s19
      %p205 = scmp.lt.s32.totalorder %s203, 31
      %s206 = scalar_select %p205, %s203, 31
      %p207 = scmp.lt.s32.totalorder %s204, 1
      %s208 = scalar_select %p207, %s204, 1
      %s209 = smul.addr %s206, 2
      %s210 = sadd.s32 %s208, %s209
      %s211 = smul.addr %s210, 4
      %s212 = scalar_lea.vmem %s0, %s211
      %s213 = smul.u32 16, %s18
      %s214 = smul.u32 2, %s19
      %s215 = smul.u32 32, %s19
      %p216 = scmp.lt.s32.totalorder %s215, 31
      %s217 = scalar_select %p216, %s215, 31
      %s218 = smul.addr %s217, 4
      %s219 = scalar_lea.vmem %s1, %s218
      %s220 = smul.u32 32, %s19
      %s221 = smul.u32 16, %s18
      %p222 = scmp.lt.s32.totalorder %s221, 31
      %s223 = scalar_select %p222, %s221, 31
      %s224 = smul.addr %s223, 8
      %s225 = scalar_lea.vmem %s3, %s224
      %s226 = smul.u32 16, %s18
      %p228 = scmp.eq.s32.totalorder %s19, 0
      // Predicated region
      $region33: #{label_svdd_forward.3} parent=31 // pred_check
        %p229 = pneg %p228
      $region34: #{label_svdd_forward.3} parent=31 // pred_check_branch
        %231 = sbr.rel (%p229) target = $region36
      $region35: #{label_svdd_forward.3} parent=31 // pred_region
        %v232 = vld [vmem:[%s2] sm:$0x1]
        %v234 = vlaneseq
        %v235 = vshrl.u32 %v234, 7
        %v236 = vsub.s32 0, %v235
        %v237 = vrot.slane %v232, %v236
        %v239 = vadd.f32 %v237, 0.0
        %240 = vst [vmem:[%s225] sm:$0xff] %v239
        %241 = vst [vmem:[%s225 + $0x8] sm:$0xff] %v239
        %242 = vst [vmem:[%s225 + $0x10] sm:$0xff] %v239
        %243 = vst [vmem:[%s225 + $0x18] sm:$0xff] %v239
        %244 = vst [vmem:[%s225 + $0x20] sm:$0xff] %v239
        %245 = vst [vmem:[%s225 + $0x28] sm:$0xff] %v239
        %246 = vst [vmem:[%s225 + $0x30] sm:$0xff] %v239
        %247 = vst [vmem:[%s225 + $0x38] sm:$0xff] %v239
        %248 = vst [vmem:[%s225 + $0x40] sm:$0xff] %v239
        %249 = vst [vmem:[%s225 + $0x48] sm:$0xff] %v239
        %250 = vst [vmem:[%s225 + $0x50] sm:$0xff] %v239
        %251 = vst [vmem:[%s225 + $0x58] sm:$0xff] %v239
        %252 = vst [vmem:[%s225 + $0x60] sm:$0xff] %v239
        %253 = vst [vmem:[%s225 + $0x68] sm:$0xff] %v239
        %254 = vst [vmem:[%s225 + $0x70] sm:$0xff] %v239
        %255 = vst [vmem:[%s225 + $0x78] sm:$0xff] %v239
      $region36: #{label_svdd_forward.3} parent=31 // pred_fallthru
        _
      %v256 = vld [vmem:[%s225] sm:$0xff]
      %v257 = vld [vmem:[%s225 + $0x8] sm:$0xff]
      %v258 = vld [vmem:[%s225 + $0x10] sm:$0xff]
      %v259 = vld [vmem:[%s225 + $0x18] sm:$0xff]
      %v260 = vld [vmem:[%s225 + $0x20] sm:$0xff]
      %v261 = vld [vmem:[%s225 + $0x28] sm:$0xff]
      %v262 = vld [vmem:[%s225 + $0x30] sm:$0xff]
      %v263 = vld [vmem:[%s225 + $0x38] sm:$0xff]
      %v264 = vld [vmem:[%s225 + $0x40] sm:$0xff]
      %v265 = vld [vmem:[%s225 + $0x48] sm:$0xff]
      %v266 = vld [vmem:[%s225 + $0x50] sm:$0xff]
      %v267 = vld [vmem:[%s225 + $0x58] sm:$0xff]
      %v268 = vld [vmem:[%s225 + $0x60] sm:$0xff]
      %v269 = vld [vmem:[%s225 + $0x68] sm:$0xff]
      %v270 = vld [vmem:[%s225 + $0x70] sm:$0xff]
      %v271 = vld [vmem:[%s225 + $0x78] sm:$0xff]
      %v272 = vld [vmem:[%s212] sm:$0xff]
      %v273 = vld [vmem:[%s212 + $0x8] sm:$0xff]
      %v274 = vld [vmem:[%s212 + $0x10] sm:$0xff]
      %v275 = vld [vmem:[%s212 + $0x18] sm:$0xff]
      %v276 = vld [vmem:[%s212 + $0x20] sm:$0xff]
      %v277 = vld [vmem:[%s212 + $0x28] sm:$0xff]
      %v278 = vld [vmem:[%s212 + $0x30] sm:$0xff]
      %v279 = vld [vmem:[%s212 + $0x38] sm:$0xff]
      %v280 = vld [vmem:[%s212 + $0x40] sm:$0xff]
      %v281 = vld [vmem:[%s212 + $0x48] sm:$0xff]
      %v282 = vld [vmem:[%s212 + $0x50] sm:$0xff]
      %v283 = vld [vmem:[%s212 + $0x58] sm:$0xff]
      %v284 = vld [vmem:[%s212 + $0x60] sm:$0xff]
      %v285 = vld [vmem:[%s212 + $0x68] sm:$0xff]
      %v286 = vld [vmem:[%s212 + $0x70] sm:$0xff]
      %v287 = vld [vmem:[%s212 + $0x78] sm:$0xff]
      %v288 = vld [vmem:[%s219] sm:$0xf]
      %v289 = vld [vmem:[%s219 + $0x4] sm:$0xf]
      %v290 = vld [vmem:[%s219 + $0x8] sm:$0xf]
      %v291 = vld [vmem:[%s219 + $0xc] sm:$0xf]
      %v292 = vld [vmem:[%s219 + $0x10] sm:$0xf]
      %v293 = vld [vmem:[%s219 + $0x14] sm:$0xf]
      %v294 = vld [vmem:[%s219 + $0x18] sm:$0xf]
      %v295 = vld [vmem:[%s219 + $0x1c] sm:$0xf]
      %v296 = vld [vmem:[%s219 + $0x20] sm:$0xf]
      %v297 = vld [vmem:[%s219 + $0x24] sm:$0xf]
      %v298 = vld [vmem:[%s219 + $0x28] sm:$0xf]
      %v299 = vld [vmem:[%s219 + $0x2c] sm:$0xf]
      %v300 = vld [vmem:[%s219 + $0x30] sm:$0xf]
      %v301 = vld [vmem:[%s219 + $0x34] sm:$0xf]
      %v302 = vld [vmem:[%s219 + $0x38] sm:$0xf]
      %v303 = vld [vmem:[%s219 + $0x3c] sm:$0xf]
      %v304 = vld [vmem:[%s219 + $0x40] sm:$0xf]
      %v305 = vld [vmem:[%s219 + $0x44] sm:$0xf]
      %v306 = vld [vmem:[%s219 + $0x48] sm:$0xf]
      %v307 = vld [vmem:[%s219 + $0x4c] sm:$0xf]
      %v308 = vld [vmem:[%s219 + $0x50] sm:$0xf]
      %v309 = vld [vmem:[%s219 + $0x54] sm:$0xf]
      %v310 = vld [vmem:[%s219 + $0x58] sm:$0xf]
      %v311 = vld [vmem:[%s219 + $0x5c] sm:$0xf]
      %v312 = vld [vmem:[%s219 + $0x60] sm:$0xf]
      %v313 = vld [vmem:[%s219 + $0x64] sm:$0xf]
      %v314 = vld [vmem:[%s219 + $0x68] sm:$0xf]
      %v315 = vld [vmem:[%s219 + $0x6c] sm:$0xf]
      %v316 = vld [vmem:[%s219 + $0x70] sm:$0xf]
      %v317 = vld [vmem:[%s219 + $0x74] sm:$0xf]
      %v318 = vld [vmem:[%s219 + $0x78] sm:$0xf]
      %v319 = vld [vmem:[%s219 + $0x7c] sm:$0xf]
      %v336 = vunpack.c.l.b16 %v272
      %v337 = vunpack.c.h.b16 %v272
      %v338 = vunpack.c.l.b16 %v273
      %v339 = vunpack.c.h.b16 %v273
      %v340 = vunpack.c.l.b16 %v274
      %v341 = vunpack.c.h.b16 %v274
      %v342 = vunpack.c.l.b16 %v275
      %v343 = vunpack.c.h.b16 %v275
      %v344 = vunpack.c.l.b16 %v276
      %v345 = vunpack.c.h.b16 %v276
      %v346 = vunpack.c.l.b16 %v277
      %v347 = vunpack.c.h.b16 %v277
      %v348 = vunpack.c.l.b16 %v278
      %v349 = vunpack.c.h.b16 %v278
      %v350 = vunpack.c.l.b16 %v279
      %v351 = vunpack.c.h.b16 %v279
      %v352 = vunpack.c.l.b16 %v280
      %v353 = vunpack.c.h.b16 %v280
      %v354 = vunpack.c.l.b16 %v281
      %v355 = vunpack.c.h.b16 %v281
      %v356 = vunpack.c.l.b16 %v282
      %v357 = vunpack.c.h.b16 %v282
      %v358 = vunpack.c.l.b16 %v283
      %v359 = vunpack.c.h.b16 %v283
      %v360 = vunpack.c.l.b16 %v284
      %v361 = vunpack.c.h.b16 %v284
      %v362 = vunpack.c.l.b16 %v285
      %v363 = vunpack.c.h.b16 %v285
      %v364 = vunpack.c.l.b16 %v286
      %v365 = vunpack.c.h.b16 %v286
      %v366 = vunpack.c.l.b16 %v287
      %v367 = vunpack.c.h.b16 %v287
      %v368 = vpack.c.b16 %v338, %v336
      %v369 = vpack.c.b16 %v339, %v337
      %v370 = vpack.c.b16 %v342, %v340
      %v371 = vpack.c.b16 %v343, %v341
      %v372 = vpack.c.b16 %v346, %v344
      %v373 = vpack.c.b16 %v347, %v345
      %v374 = vpack.c.b16 %v350, %v348
      %v375 = vpack.c.b16 %v351, %v349
      %v376 = vpack.c.b16 %v354, %v352
      %v377 = vpack.c.b16 %v355, %v353
      %v378 = vpack.c.b16 %v358, %v356
      %v379 = vpack.c.b16 %v359, %v357
      %v380 = vpack.c.b16 %v362, %v360
      %v381 = vpack.c.b16 %v363, %v361
      %v382 = vpack.c.b16 %v366, %v364
      %v383 = vpack.c.b16 %v367, %v365
      %v432 = vunpack.c.l.b16 %v288
      %v433 = vunpack.c.l.b16 %v289
      %v434 = vunpack.c.l.b16 %v290
      %v435 = vunpack.c.l.b16 %v291
      %v436 = vunpack.c.l.b16 %v292
      %v437 = vunpack.c.l.b16 %v293
      %v438 = vunpack.c.l.b16 %v294
      %v439 = vunpack.c.l.b16 %v295
      %v440 = vunpack.c.l.b16 %v296
      %v441 = vunpack.c.l.b16 %v297
      %v442 = vunpack.c.l.b16 %v298
      %v443 = vunpack.c.l.b16 %v299
      %v444 = vunpack.c.l.b16 %v300
      %v445 = vunpack.c.l.b16 %v301
      %v446 = vunpack.c.l.b16 %v302
      %v447 = vunpack.c.l.b16 %v303
      %v448 = vunpack.c.l.b16 %v304
      %v449 = vunpack.c.l.b16 %v305
      %v450 = vunpack.c.l.b16 %v306
      %v451 = vunpack.c.l.b16 %v307
      %v452 = vunpack.c.l.b16 %v308
      %v453 = vunpack.c.l.b16 %v309
      %v454 = vunpack.c.l.b16 %v310
      %v455 = vunpack.c.l.b16 %v311
      %v456 = vunpack.c.l.b16 %v312
      %v457 = vunpack.c.l.b16 %v313
      %v458 = vunpack.c.l.b16 %v314
      %v459 = vunpack.c.l.b16 %v315
      %v460 = vunpack.c.l.b16 %v316
      %v461 = vunpack.c.l.b16 %v317
      %v462 = vunpack.c.l.b16 %v318
      %v463 = vunpack.c.l.b16 %v319
      %v464 = vpack.c.b16 %v433, %v432
      %v465 = vpack.c.b16 %v435, %v434
      %v466 = vpack.c.b16 %v437, %v436
      %v467 = vpack.c.b16 %v439, %v438
      %v468 = vpack.c.b16 %v441, %v440
      %v469 = vpack.c.b16 %v443, %v442
      %v470 = vpack.c.b16 %v445, %v444
      %v471 = vpack.c.b16 %v447, %v446
      %v472 = vpack.c.b16 %v449, %v448
      %v473 = vpack.c.b16 %v451, %v450
      %v474 = vpack.c.b16 %v453, %v452
      %v475 = vpack.c.b16 %v455, %v454
      %v476 = vpack.c.b16 %v457, %v456
      %v477 = vpack.c.b16 %v459, %v458
      %v478 = vpack.c.b16 %v461, %v460
      %v479 = vpack.c.b16 %v463, %v462
      %496 = vmatprep.subr.bf16.mxu0 0
      %497 = vmatpush1.bf16.msra.mxu0 %v471
      %498 = vmatprep.subr.bf16.mxu0 0
      %499 = vmatpush1.bf16.msra.mxu0 %v470
      %500 = vmatprep.subr.bf16.mxu0 0
      %501 = vmatpush1.bf16.msra.mxu0 %v469
      %502 = vmatprep.subr.bf16.mxu0 0
      %503 = vmatpush1.bf16.msra.mxu0 %v468
      %504 = vmatprep.subr.bf16.mxu0 0
      %505 = vmatpush1.bf16.msra.mxu0 %v467
      %506 = vmatprep.subr.bf16.mxu0 0
      %507 = vmatpush1.bf16.msra.mxu0 %v466
      %508 = vmatprep.subr.bf16.mxu0 0
      %509 = vmatpush1.bf16.msra.mxu0 %v465
      %510 = vmatprep.subr.bf16.mxu0 0
      %511 = vmatpush1.bf16.msra.mxu0 %v464
      %512 = vmatprep.subr.bf16.mxu0 0
      %513 = vmatpush2.bf16.msra.mxu0 %v479
      %514 = vmatprep.subr.bf16.mxu0 0
      %515 = vmatpush2.bf16.msra.mxu0 %v478
      %516 = vmatprep.subr.bf16.mxu0 0
      %517 = vmatpush2.bf16.msra.mxu0 %v477
      %518 = vmatprep.subr.bf16.mxu0 0
      %519 = vmatpush2.bf16.msra.mxu0 %v476
      %520 = vmatprep.subr.bf16.mxu0 0
      %521 = vmatpush2.bf16.msra.mxu0 %v475
      %522 = vmatprep.subr.bf16.mxu0 0
      %523 = vmatpush2.bf16.msra.mxu0 %v474
      %524 = vmatprep.subr.bf16.mxu0 0
      %525 = vmatpush2.bf16.msra.mxu0 %v473
      %526 = vmatprep.subr.bf16.mxu0 0
      %527 = vmatpush2.bf16.msra.mxu0 %v472
      %528 = vmatprep.mubr.bf16.mxu0 %v369
      %529 = vmatmul.mubr.bf16.gmra.mxu0 %v368
      %v530 = vpop.f32.mrf.mxu0
      %v531 = vadd.f32 0.0, %v530
      %v532 = vpop.f32.mrf.mxu0
      %v533 = vpop.f32.mrf.mxu0
      %v534 = vadd.f32 0.0, %v533
      %v535 = vpop.f32.mrf.mxu0
      %536 = vmatprep.mubr.bf16.mxu0 %v371
      %537 = vmatmul.mubr.bf16.gmra.mxu0 %v370
      %v538 = vpop.f32.mrf.mxu0
      %v539 = vadd.f32 0.0, %v538
      %v540 = vpop.f32.mrf.mxu0
      %v541 = vpop.f32.mrf.mxu0
      %v542 = vadd.f32 0.0, %v541
      %v543 = vpop.f32.mrf.mxu0
      %544 = vmatprep.mubr.bf16.mxu0 %v373
      %545 = vmatmul.mubr.bf16.gmra.mxu0 %v372
      %v546 = vpop.f32.mrf.mxu0
      %v547 = vadd.f32 0.0, %v546
      %v548 = vpop.f32.mrf.mxu0
      %v549 = vpop.f32.mrf.mxu0
      %v550 = vadd.f32 0.0, %v549
      %v551 = vpop.f32.mrf.mxu0
      %552 = vmatprep.mubr.bf16.mxu0 %v375
      %553 = vmatmul.mubr.bf16.gmra.mxu0 %v374
      %v554 = vpop.f32.mrf.mxu0
      %v555 = vadd.f32 0.0, %v554
      %v556 = vpop.f32.mrf.mxu0
      %v557 = vpop.f32.mrf.mxu0
      %v558 = vadd.f32 0.0, %v557
      %v559 = vpop.f32.mrf.mxu0
      %560 = vmatprep.mubr.bf16.mxu0 %v377
      %561 = vmatmul.mubr.bf16.gmra.mxu0 %v376
      %v562 = vpop.f32.mrf.mxu0
      %v563 = vadd.f32 0.0, %v562
      %v564 = vpop.f32.mrf.mxu0
      %v565 = vpop.f32.mrf.mxu0
      %v566 = vadd.f32 0.0, %v565
      %v567 = vpop.f32.mrf.mxu0
      %568 = vmatprep.mubr.bf16.mxu0 %v379
      %569 = vmatmul.mubr.bf16.gmra.mxu0 %v378
      %v570 = vpop.f32.mrf.mxu0
      %v571 = vadd.f32 0.0, %v570
      %v572 = vpop.f32.mrf.mxu0
      %v573 = vpop.f32.mrf.mxu0
      %v574 = vadd.f32 0.0, %v573
      %v575 = vpop.f32.mrf.mxu0
      %576 = vmatprep.mubr.bf16.mxu0 %v381
      %577 = vmatmul.mubr.bf16.gmra.mxu0 %v380
      %v578 = vpop.f32.mrf.mxu0
      %v579 = vadd.f32 0.0, %v578
      %v580 = vpop.f32.mrf.mxu0
      %v581 = vpop.f32.mrf.mxu0
      %v582 = vadd.f32 0.0, %v581
      %v583 = vpop.f32.mrf.mxu0
      %584 = vmatprep.mubr.bf16.mxu0 %v383
      %585 = vmatmul.mubr.bf16.gmra.mxu0 %v382
      %v586 = vpop.f32.mrf.mxu0
      %v587 = vadd.f32 0.0, %v586
      %v588 = vpop.f32.mrf.mxu0
      %v589 = vpop.f32.mrf.mxu0
      %v590 = vadd.f32 0.0, %v589
      %v591 = vpop.f32.mrf.mxu0
      %592 = vdwg.mxu0
      %v593 = vadd.f32 %v256, %v531
      %v594 = vadd.f32 %v257, %v534
      %v595 = vadd.f32 %v258, %v539
      %v596 = vadd.f32 %v259, %v542
      %v597 = vadd.f32 %v260, %v547
      %v598 = vadd.f32 %v261, %v550
      %v599 = vadd.f32 %v262, %v555
      %v600 = vadd.f32 %v263, %v558
      %v601 = vadd.f32 %v264, %v563
      %v602 = vadd.f32 %v265, %v566
      %v603 = vadd.f32 %v266, %v571
      %v604 = vadd.f32 %v267, %v574
      %v605 = vadd.f32 %v268, %v579
      %v606 = vadd.f32 %v269, %v582
      %v607 = vadd.f32 %v270, %v587
      %v608 = vadd.f32 %v271, %v590
      %609 = vst [vmem:[%s225] sm:$0xff] %v593
      %610 = vst [vmem:[%s225 + $0x8] sm:$0xff] %v594
      %611 = vst [vmem:[%s225 + $0x10] sm:$0xff] %v595
      %612 = vst [vmem:[%s225 + $0x18] sm:$0xff] %v596
      %613 = vst [vmem:[%s225 + $0x20] sm:$0xff] %v597
      %614 = vst [vmem:[%s225 + $0x28] sm:$0xff] %v598
      %615 = vst [vmem:[%s225 + $0x30] sm:$0xff] %v599
      %616 = vst [vmem:[%s225 + $0x38] sm:$0xff] %v600
      %617 = vst [vmem:[%s225 + $0x40] sm:$0xff] %v601
      %618 = vst [vmem:[%s225 + $0x48] sm:$0xff] %v602
      %619 = vst [vmem:[%s225 + $0x50] sm:$0xff] %v603
      %620 = vst [vmem:[%s225 + $0x58] sm:$0xff] %v604
      %621 = vst [vmem:[%s225 + $0x60] sm:$0xff] %v605
      %622 = vst [vmem:[%s225 + $0x68] sm:$0xff] %v606
      %623 = vst [vmem:[%s225 + $0x70] sm:$0xff] %v607
      %624 = vst [vmem:[%s225 + $0x78] sm:$0xff] %v608
      %s625 = smul.u32 16, %s18
      %p626 = scmp.lt.s32.totalorder %s625, 31
      %s627 = scalar_select %p626, %s625, 31
      %s628 = smul.addr %s627, 8
      %s629 = scalar_lea.vmem %s3, %s628
      // Predicated region
      $region37: #{label_svdd_forward.3} parent=31 // pred_check
        %p630 = pneg %p119
      $region38: #{label_svdd_forward.3} parent=31 // pred_check_branch
        %632 = sbr.rel (%p630) target = $region40
      $region39: #{label_svdd_forward.3} parent=31 // pred_region
        %s633 = smul.u32 16, %s18
      $region40: #{label_svdd_forward.3} parent=31 // pred_fallthru
        _
    $region32: #{label_svdd_forward.3} parent=5 // pred_fallthru
      _
    %p634 = scmp.le.s32.totalorder 2, %s9
    // Predicated region
    $region41: #{label_svdd_forward.3} parent=5 // pred_check
      %p635 = pneg %p634
    $region42: #{label_svdd_forward.3} parent=5 // pred_check_branch
      %637 = sbr.rel (%p635) target = $region44
    $region43: #{label_svdd_forward.3} parent=5 // pred_region
      %s638 = ssub.s32 %s9, 2
      // Predicated region
      $region45: #{label_svdd_forward.3} parent=43 // pred_check
        %p639 = pneg %p125
      $region46: #{label_svdd_forward.3} parent=43 // pred_check_branch
        %641 = sbr.rel (%p639) target = $region48
      $region47: #{label_svdd_forward.3} parent=43 // pred_region
        %s642 = smul.u32 16, %s20
        %p643 = scmp.lt.s32.totalorder %s642, 31
        %s644 = scalar_select %p643, %s642, 31
        %s645 = smul.addr %s644, 8
        %s646 = scalar_lea.vmem %s3, %s645
      $region48: #{label_svdd_forward.3} parent=43 // pred_fallthru
        _
    $region44: #{label_svdd_forward.3} parent=5 // pred_fallthru
      _
  $region6: #{label_svdd_forward.3} parent=0 // loop_footer
    %s13 = sadd.s32 1, %s9
  $region7: #{label_svdd_forward.3} parent=0 // loop_footer_branch
    %8 = sbr.rel target = $region3
  $region8: #{label_svdd_forward.3} parent=0 // loop_exit
    _

// kernel: label_svdd_forward.2
$region0: #{label_svdd_forward.2}
  #allocation0 [shape = 'u32[]', space=smem, size = 0x4, offset = 0x4, fixed_abs, tag = 'smem constant byte address 0x4 - core index']
  #allocation1 [shape = 'u32[144,128]{1,0:T(1,128)}', space=vmem, size = 0x12000, scoped, tag = 'internal scratch']
  #allocation2 [shape = 'f32[128,128]{1,0:T(8,128)}', space=vmem, size = 0x10000, scoped, tag = 'scratch operand']
  %s0 = inlined_call_operand.vmem [shape: bf16[256,256], index: 0, kind: input, shape index: {}]
  %s1 = inlined_call_operand.vmem [shape: bf16[256,128], index: 1, kind: input, shape index: {}]
  %s2 = inlined_call_operand.vmem [shape: f32[1,128], index: 2, kind: input, shape index: {}]
  %s3 = inlined_call_operand.vmem [shape: bf16[256,128], index: 3, kind: output, shape index: {}]
  %s4 = sld [smem:[#allocation0]]
  $region53: #{label_svdd_forward.2} parent=0
    _
  %s6 = ssub.s32 1, %s4
  %s7 = scalar_select 0, %s6, %s4
  loop: start=0, step=1, limit=4
  $region2: #{label_svdd_forward.2} parent=0 // loop_pre_header
    _
  $region3: #{label_svdd_forward.2} parent=0 // loop_header
    %s9 = sphi 0, %s13
    %p10 = scmp.ge.s32.totalorder %s9, 4
    %s16 = sphi 0, %s28
    %s17 = sphi 0, %s24
    %s18 = sphi 0, %s16
    %s19 = sphi 0, %s17
    %s20 = sphi 0, %s18
    %s21 = sphi 0, %s19
    %s33 = sphi 0, %s35
    %s36 = sphi 0, %s33
    %s37 = sphi 0, %s36
    %s53 = sphi 0, %s37
    %s59 = sphi 0, %s61
    %s62 = sphi 0, %s59
    %s63 = sphi 0, %s62
    %s79 = sphi 0, %s63
    %s83 = sphi 0, %s83
    %s85 = sphi 0, %s83
    %s86 = sphi 0, %s85
    %s100 = sphi 0, %s86
    %s106 = sphi 0, %s108
    %s109 = sphi 0, %s106
    %s110 = sphi 0, %s109
    %s126 = sphi 0, %s110
  $region4: #{label_svdd_forward.2} parent=0 // loop_header_branch
    %12 = sbr.rel (%p10) target = $region8
  $region5: #{label_svdd_forward.2} parent=0 // loop_body
    %s14 = ssub.s32 %s9, 1
    %s15 = ssub.s32 %s9, 2
    %s22 = sadd.s32 1, %s17
    %p23 = scmp.ge.s32.totalorder %s22, 1
    %s24 = scalar_select %p23, 0, %s22
    %s25 = sadd.s32 1, %s16
    %s26 = scalar_select %p23, %s25, %s16
    %p27 = scmp.ge.s32.totalorder %s26, 2
    %s28 = scalar_select %p27, 0, %s26
    %s29 = ssub.s32 %s16, %s28
    %s30 = ssub.s32 %s17, %s24
    %s31 = sor.u32 %s29, %s30
    %p32 = scmp.eq.s32.totalorder %s31, 0
    %s34 = sadd.s32 %s33, 1
    %s35 = scalar_select %p32, %s33, %s34
    %p38 = pneg %p32
    %p39 = scmp.eq.s32.totalorder %s9, 1
    %p40 = por %p38, %p39
    %p41 = scmp.ne.s32.totalorder %s33, %s36
    %p42 = scmp.eq.s32.totalorder %s9, 0
    %p43 = por %p41, %p42
    %p44 = scmp.ne.s32.totalorder %s33, %s36
    %p45 = scmp.eq.s32.totalorder %s14, 1
    %p46 = por %p44, %p45
    %p47 = scmp.ne.s32.totalorder %s36, %s37
    %p48 = scmp.eq.s32.totalorder %s14, 0
    %p49 = por %p47, %p48
    %p50 = scmp.ne.s32.totalorder %s36, %s37
    %p51 = scmp.eq.s32.totalorder %s15, 1
    %p52 = por %p50, %p51
    %p54 = scmp.ne.s32.totalorder %s37, %s53
    %p55 = scmp.eq.s32.totalorder %s15, 0
    %p56 = por %p54, %p55
    %s57 = ssub.s32 %s17, %s24
    %p58 = scmp.eq.s32.totalorder %s57, 0
    %s60 = sadd.s32 %s59, 1
    %s61 = scalar_select %p58, %s59, %s60
    %p64 = pneg %p58
    %p65 = scmp.eq.s32.totalorder %s9, 1
    %p66 = por %p64, %p65
    %p67 = scmp.ne.s32.totalorder %s59, %s62
    %p68 = scmp.eq.s32.totalorder %s9, 0
    %p69 = por %p67, %p68
    %p70 = scmp.ne.s32.totalorder %s59, %s62
    %p71 = scmp.eq.s32.totalorder %s14, 1
    %p72 = por %p70, %p71
    %p73 = scmp.ne.s32.totalorder %s62, %s63
    %p74 = scmp.eq.s32.totalorder %s14, 0
    %p75 = por %p73, %p74
    %p76 = scmp.ne.s32.totalorder %s62, %s63
    %p77 = scmp.eq.s32.totalorder %s15, 1
    %p78 = por %p76, %p77
    %p80 = scmp.ne.s32.totalorder %s63, %s79
    %p81 = scmp.eq.s32.totalorder %s15, 0
    %p82 = por %p80, %p81
    %s84 = sadd.s32 %s83, 1
    %p87 = scmp.eq.s32.totalorder %s9, 1
    %p88 = scmp.ne.s32.totalorder %s83, %s85
    %p89 = scmp.eq.s32.totalorder %s9, 0
    %p90 = por %p88, %p89
    %p91 = scmp.ne.s32.totalorder %s83, %s85
    %p92 = scmp.eq.s32.totalorder %s14, 1
    %p93 = por %p91, %p92
    %p94 = scmp.ne.s32.totalorder %s85, %s86
    %p95 = scmp.eq.s32.totalorder %s14, 0
    %p96 = por %p94, %p95
    %p97 = scmp.ne.s32.totalorder %s85, %s86
    %p98 = scmp.eq.s32.totalorder %s15, 1
    %p99 = por %p97, %p98
    %p101 = scmp.ne.s32.totalorder %s86, %s100
    %p102 = scmp.eq.s32.totalorder %s15, 0
    %p103 = por %p101, %p102
    %s104 = ssub.s32 %s16, %s28
    %p105 = scmp.eq.s32.totalorder %s104, 0
    %s107 = sadd.s32 %s106, 1
    %s108 = scalar_select %p105, %s106, %s107
    %p111 = pneg %p105
    %p112 = scmp.eq.s32.totalorder %s9, 1
    %p113 = por %p111, %p112
    %p114 = scmp.ne.s32.totalorder %s106, %s109
    %p115 = scmp.eq.s32.totalorder %s9, 0
    %p116 = por %p114, %p115
    %p117 = scmp.ne.s32.totalorder %s106, %s109
    %p118 = scmp.eq.s32.totalorder %s14, 1
    %p119 = por %p117, %p118
    %p120 = scmp.ne.s32.totalorder %s109, %s110
    %p121 = scmp.eq.s32.totalorder %s14, 0
    %p122 = por %p120, %p121
    %p123 = scmp.ne.s32.totalorder %s109, %s110
    %p124 = scmp.eq.s32.totalorder %s15, 1
    %p125 = por %p123, %p124
    %p127 = scmp.ne.s32.totalorder %s110, %s126
    %p128 = scmp.eq.s32.totalorder %s15, 0
    %p129 = por %p127, %p128
    %p130 = scmp.le.s32.totalorder 1, %s9
    %p131 = scmp.lt.s32.totalorder %s9, 3
    %p132 = pnand %p130, %p131
    %p133 = pneg %p132
    // Predicated region
    $region9: #{label_svdd_forward.2} parent=5 // pred_check
      _
    $region10: #{label_svdd_forward.2} parent=5 // pred_check_branch
      %135 = sbr.rel (%p132) target = $region12
    $region11: #{label_svdd_forward.2} parent=5 // pred_region
      %s136 = ssub.s32 %s9, 1
      // Predicated region
      $region13: #{label_svdd_forward.2} parent=11 // pred_check
        %p137 = pneg %p75
      $region14: #{label_svdd_forward.2} parent=11 // pred_check_branch
        %139 = sbr.rel (%p137) target = $region16
      $region15: #{label_svdd_forward.2} parent=11 // pred_region
        %s140 = smul.u32 32, %s19
        %p141 = scmp.lt.s32.totalorder %s140, 31
        %s142 = scalar_select %p141, %s140, 31
        %s143 = smul.addr %s142, 4
        %s144 = scalar_lea.vmem %s1, %s143
        %s145 = smul.u32 32, %s19
      $region16: #{label_svdd_forward.2} parent=11 // pred_fallthru
        _
      // Predicated region
      $region17: #{label_svdd_forward.2} parent=11 // pred_check
        %p146 = pneg %p96
      $region18: #{label_svdd_forward.2} parent=11 // pred_check_branch
        %148 = sbr.rel (%p146) target = $region20
      $region19: #{label_svdd_forward.2} parent=11 // pred_region
        _
      $region20: #{label_svdd_forward.2} parent=11 // pred_fallthru
        _
    $region12: #{label_svdd_forward.2} parent=5 // pred_fallthru
      _
    %p149 = scmp.lt.s32.totalorder %s9, 2
    // Predicated region
    $region21: #{label_svdd_forward.2} parent=5 // pred_check
      %p150 = pneg %p149
    $region22: #{label_svdd_forward.2} parent=5 // pred_check_branch
      %152 = sbr.rel (%p150) target = $region24
    $region23: #{label_svdd_forward.2} parent=5 // pred_region
      // Predicated region
      $region25: #{label_svdd_forward.2} parent=23 // pred_check
        %p153 = pneg %p43
      $region26: #{label_svdd_forward.2} parent=23 // pred_check_branch
        %155 = sbr.rel (%p153) target = $region28
      $region27: #{label_svdd_forward.2} parent=23 // pred_region
        %s156 = smul.u32 16, %s16
        %s157 = smul.u32 2, %s17
        %p158 = scmp.lt.s32.totalorder %s156, 31
        %s159 = scalar_select %p158, %s156, 31
        %p160 = scmp.lt.s32.totalorder %s157, 1
        %s161 = scalar_select %p160, %s157, 1
        %s162 = smul.addr %s159, 2
        %s163 = sadd.s32 %s161, %s162
        %s164 = smul.addr %s163, 4
        %s165 = scalar_lea.vmem %s0, %s164
        %s166 = smul.u32 16, %s16
        %s167 = smul.u32 2, %s17
      $region28: #{label_svdd_forward.2} parent=23 // pred_fallthru
        _
    $region24: #{label_svdd_forward.2} parent=5 // pred_fallthru
      _
    %p168 = scmp.le.s32.totalorder 1, %s9
    %p169 = scmp.lt.s32.totalorder %s9, 3
    %p170 = pnand %p168, %p169
    %p171 = pneg %p170
    // Predicated region
    $region29: #{label_svdd_forward.2} parent=5 // pred_check
      _
    $region30: #{label_svdd_forward.2} parent=5 // pred_check_branch
      %173 = sbr.rel (%p170) target = $region32
    $region31: #{label_svdd_forward.2} parent=5 // pred_region
      %s174 = ssub.s32 %s9, 1
      %s175 = smul.u32 16, %s18
      %s176 = smul.u32 2, %s19
      %p177 = scmp.lt.s32.totalorder %s175, 31
      %s178 = scalar_select %p177, %s175, 31
      %p179 = scmp.lt.s32.totalorder %s176, 1
      %s180 = scalar_select %p179, %s176, 1
      %s181 = smul.addr %s178, 2
      %s182 = sadd.s32 %s180, %s181
      %s183 = smul.addr %s182, 4
      %s184 = scalar_lea.vmem %s0, %s183
      %p185 = pneg %p49
      %p186 = pneg %p46
      %s187 = smul.u32 32, %s19
      %p188 = scmp.lt.s32.totalorder %s187, 31
      %s189 = scalar_select %p188, %s187, 31
      %s190 = smul.addr %s189, 4
      %s191 = scalar_lea.vmem %s1, %s190
      %p192 = pneg %p75
      %p193 = pneg %p72
      %p194 = pneg %p96
      %p195 = pneg %p93
      %p196 = pneg %p122
      %p197 = pneg %p119
      %s198 = smul.u32 16, %s18
      %p199 = scmp.lt.s32.totalorder %s198, 31
      %s200 = scalar_select %p199, %s198, 31
      %s201 = smul.addr %s200, 4
      %s202 = scalar_lea.vmem %s3, %s201
      %s203 = smul.u32 16, %s18
      %s204 = smul.u32 2, %s19
      %p205 = scmp.lt.s32.totalorder %s203, 31
      %s206 = scalar_select %p205, %s203, 31
      %p207 = scmp.lt.s32.totalorder %s204, 1
      %s208 = scalar_select %p207, %s204, 1
      %s209 = smul.addr %s206, 2
      %s210 = sadd.s32 %s208, %s209
      %s211 = smul.addr %s210, 4
      %s212 = scalar_lea.vmem %s0, %s211
      %s213 = smul.u32 16, %s18
      %s214 = smul.u32 2, %s19
      %s215 = smul.u32 32, %s19
      %p216 = scmp.lt.s32.totalorder %s215, 31
      %s217 = scalar_select %p216, %s215, 31
      %s218 = smul.addr %s217, 4
      %s219 = scalar_lea.vmem %s1, %s218
      %s220 = smul.u32 32, %s19
      %s221 = smul.u32 16, %s18
      %p222 = scmp.lt.s32.totalorder %s221, 31
      %s223 = scalar_select %p222, %s221, 31
      %s224 = smul.addr %s223, 4
      %s225 = scalar_lea.vmem %s3, %s224
      %s226 = smul.u32 16, %s18
      %p228 = scmp.eq.s32.totalorder %s19, 0
      // Predicated region
      $region33: #{label_svdd_forward.2} parent=31 // pred_check
        %p229 = pneg %p228
      $region34: #{label_svdd_forward.2} parent=31 // pred_check_branch
        %231 = sbr.rel (%p229) target = $region36
      $region35: #{label_svdd_forward.2} parent=31 // pred_region
        %232 = vst [vmem:[#allocation2] sm:$0xff] 0.0
        %233 = vst [vmem:[#allocation2 + $0x8] sm:$0xff] 0.0
        %234 = vst [vmem:[#allocation2 + $0x10] sm:$0xff] 0.0
        %235 = vst [vmem:[#allocation2 + $0x18] sm:$0xff] 0.0
        %236 = vst [vmem:[#allocation2 + $0x20] sm:$0xff] 0.0
        %237 = vst [vmem:[#allocation2 + $0x28] sm:$0xff] 0.0
        %238 = vst [vmem:[#allocation2 + $0x30] sm:$0xff] 0.0
        %239 = vst [vmem:[#allocation2 + $0x38] sm:$0xff] 0.0
        %240 = vst [vmem:[#allocation2 + $0x40] sm:$0xff] 0.0
        %241 = vst [vmem:[#allocation2 + $0x48] sm:$0xff] 0.0
        %242 = vst [vmem:[#allocation2 + $0x50] sm:$0xff] 0.0
        %243 = vst [vmem:[#allocation2 + $0x58] sm:$0xff] 0.0
        %244 = vst [vmem:[#allocation2 + $0x60] sm:$0xff] 0.0
        %245 = vst [vmem:[#allocation2 + $0x68] sm:$0xff] 0.0
        %246 = vst [vmem:[#allocation2 + $0x70] sm:$0xff] 0.0
        %247 = vst [vmem:[#allocation2 + $0x78] sm:$0xff] 0.0
      $region36: #{label_svdd_forward.2} parent=31 // pred_fallthru
        _
      %v248 = vld [vmem:[#allocation2] sm:$0xff]
      %v249 = vld [vmem:[#allocation2 + $0x8] sm:$0xff]
      %v250 = vld [vmem:[#allocation2 + $0x10] sm:$0xff]
      %v251 = vld [vmem:[#allocation2 + $0x18] sm:$0xff]
      %v252 = vld [vmem:[#allocation2 + $0x20] sm:$0xff]
      %v253 = vld [vmem:[#allocation2 + $0x28] sm:$0xff]
      %v254 = vld [vmem:[#allocation2 + $0x30] sm:$0xff]
      %v255 = vld [vmem:[#allocation2 + $0x38] sm:$0xff]
      %v256 = vld [vmem:[#allocation2 + $0x40] sm:$0xff]
      %v257 = vld [vmem:[#allocation2 + $0x48] sm:$0xff]
      %v258 = vld [vmem:[#allocation2 + $0x50] sm:$0xff]
      %v259 = vld [vmem:[#allocation2 + $0x58] sm:$0xff]
      %v260 = vld [vmem:[#allocation2 + $0x60] sm:$0xff]
      %v261 = vld [vmem:[#allocation2 + $0x68] sm:$0xff]
      %v262 = vld [vmem:[#allocation2 + $0x70] sm:$0xff]
      %v263 = vld [vmem:[#allocation2 + $0x78] sm:$0xff]
      %v264 = vld [vmem:[%s212] sm:$0xff]
      %v265 = vld [vmem:[%s212 + $0x8] sm:$0xff]
      %v266 = vld [vmem:[%s212 + $0x10] sm:$0xff]
      %v267 = vld [vmem:[%s212 + $0x18] sm:$0xff]
      %v268 = vld [vmem:[%s212 + $0x20] sm:$0xff]
      %v269 = vld [vmem:[%s212 + $0x28] sm:$0xff]
      %v270 = vld [vmem:[%s212 + $0x30] sm:$0xff]
      %v271 = vld [vmem:[%s212 + $0x38] sm:$0xff]
      %v272 = vld [vmem:[%s212 + $0x40] sm:$0xff]
      %v273 = vld [vmem:[%s212 + $0x48] sm:$0xff]
      %v274 = vld [vmem:[%s212 + $0x50] sm:$0xff]
      %v275 = vld [vmem:[%s212 + $0x58] sm:$0xff]
      %v276 = vld [vmem:[%s212 + $0x60] sm:$0xff]
      %v277 = vld [vmem:[%s212 + $0x68] sm:$0xff]
      %v278 = vld [vmem:[%s212 + $0x70] sm:$0xff]
      %v279 = vld [vmem:[%s212 + $0x78] sm:$0xff]
      %v280 = vld [vmem:[%s219] sm:$0xf]
      %v281 = vld [vmem:[%s219 + $0x4] sm:$0xf]
      %v282 = vld [vmem:[%s219 + $0x8] sm:$0xf]
      %v283 = vld [vmem:[%s219 + $0xc] sm:$0xf]
      %v284 = vld [vmem:[%s219 + $0x10] sm:$0xf]
      %v285 = vld [vmem:[%s219 + $0x14] sm:$0xf]
      %v286 = vld [vmem:[%s219 + $0x18] sm:$0xf]
      %v287 = vld [vmem:[%s219 + $0x1c] sm:$0xf]
      %v288 = vld [vmem:[%s219 + $0x20] sm:$0xf]
      %v289 = vld [vmem:[%s219 + $0x24] sm:$0xf]
      %v290 = vld [vmem:[%s219 + $0x28] sm:$0xf]
      %v291 = vld [vmem:[%s219 + $0x2c] sm:$0xf]
      %v292 = vld [vmem:[%s219 + $0x30] sm:$0xf]
      %v293 = vld [vmem:[%s219 + $0x34] sm:$0xf]
      %v294 = vld [vmem:[%s219 + $0x38] sm:$0xf]
      %v295 = vld [vmem:[%s219 + $0x3c] sm:$0xf]
      %v296 = vld [vmem:[%s219 + $0x40] sm:$0xf]
      %v297 = vld [vmem:[%s219 + $0x44] sm:$0xf]
      %v298 = vld [vmem:[%s219 + $0x48] sm:$0xf]
      %v299 = vld [vmem:[%s219 + $0x4c] sm:$0xf]
      %v300 = vld [vmem:[%s219 + $0x50] sm:$0xf]
      %v301 = vld [vmem:[%s219 + $0x54] sm:$0xf]
      %v302 = vld [vmem:[%s219 + $0x58] sm:$0xf]
      %v303 = vld [vmem:[%s219 + $0x5c] sm:$0xf]
      %v304 = vld [vmem:[%s219 + $0x60] sm:$0xf]
      %v305 = vld [vmem:[%s219 + $0x64] sm:$0xf]
      %v306 = vld [vmem:[%s219 + $0x68] sm:$0xf]
      %v307 = vld [vmem:[%s219 + $0x6c] sm:$0xf]
      %v308 = vld [vmem:[%s219 + $0x70] sm:$0xf]
      %v309 = vld [vmem:[%s219 + $0x74] sm:$0xf]
      %v310 = vld [vmem:[%s219 + $0x78] sm:$0xf]
      %v311 = vld [vmem:[%s219 + $0x7c] sm:$0xf]
      %v328 = vunpack.c.l.b16 %v264
      %v329 = vunpack.c.h.b16 %v264
      %v330 = vunpack.c.l.b16 %v265
      %v331 = vunpack.c.h.b16 %v265
      %v332 = vunpack.c.l.b16 %v266
      %v333 = vunpack.c.h.b16 %v266
      %v334 = vunpack.c.l.b16 %v267
      %v335 = vunpack.c.h.b16 %v267
      %v336 = vunpack.c.l.b16 %v268
      %v337 = vunpack.c.h.b16 %v268
      %v338 = vunpack.c.l.b16 %v269
      %v339 = vunpack.c.h.b16 %v269
      %v340 = vunpack.c.l.b16 %v270
      %v341 = vunpack.c.h.b16 %v270
      %v342 = vunpack.c.l.b16 %v271
      %v343 = vunpack.c.h.b16 %v271
      %v344 = vunpack.c.l.b16 %v272
      %v345 = vunpack.c.h.b16 %v272
      %v346 = vunpack.c.l.b16 %v273
      %v347 = vunpack.c.h.b16 %v273
      %v348 = vunpack.c.l.b16 %v274
      %v349 = vunpack.c.h.b16 %v274
      %v350 = vunpack.c.l.b16 %v275
      %v351 = vunpack.c.h.b16 %v275
      %v352 = vunpack.c.l.b16 %v276
      %v353 = vunpack.c.h.b16 %v276
      %v354 = vunpack.c.l.b16 %v277
      %v355 = vunpack.c.h.b16 %v277
      %v356 = vunpack.c.l.b16 %v278
      %v357 = vunpack.c.h.b16 %v278
      %v358 = vunpack.c.l.b16 %v279
      %v359 = vunpack.c.h.b16 %v279
      %v360 = vpack.c.b16 %v330, %v328
      %v361 = vpack.c.b16 %v331, %v329
      %v362 = vpack.c.b16 %v334, %v332
      %v363 = vpack.c.b16 %v335, %v333
      %v364 = vpack.c.b16 %v338, %v336
      %v365 = vpack.c.b16 %v339, %v337
      %v366 = vpack.c.b16 %v342, %v340
      %v367 = vpack.c.b16 %v343, %v341
      %v368 = vpack.c.b16 %v346, %v344
      %v369 = vpack.c.b16 %v347, %v345
      %v370 = vpack.c.b16 %v350, %v348
      %v371 = vpack.c.b16 %v351, %v349
      %v372 = vpack.c.b16 %v354, %v352
      %v373 = vpack.c.b16 %v355, %v353
      %v374 = vpack.c.b16 %v358, %v356
      %v375 = vpack.c.b16 %v359, %v357
      %v424 = vunpack.c.l.b16 %v280
      %v425 = vunpack.c.l.b16 %v281
      %v426 = vunpack.c.l.b16 %v282
      %v427 = vunpack.c.l.b16 %v283
      %v428 = vunpack.c.l.b16 %v284
      %v429 = vunpack.c.l.b16 %v285
      %v430 = vunpack.c.l.b16 %v286
      %v431 = vunpack.c.l.b16 %v287
      %v432 = vunpack.c.l.b16 %v288
      %v433 = vunpack.c.l.b16 %v289
      %v434 = vunpack.c.l.b16 %v290
      %v435 = vunpack.c.l.b16 %v291
      %v436 = vunpack.c.l.b16 %v292
      %v437 = vunpack.c.l.b16 %v293
      %v438 = vunpack.c.l.b16 %v294
      %v439 = vunpack.c.l.b16 %v295
      %v440 = vunpack.c.l.b16 %v296
      %v441 = vunpack.c.l.b16 %v297
      %v442 = vunpack.c.l.b16 %v298
      %v443 = vunpack.c.l.b16 %v299
      %v444 = vunpack.c.l.b16 %v300
      %v445 = vunpack.c.l.b16 %v301
      %v446 = vunpack.c.l.b16 %v302
      %v447 = vunpack.c.l.b16 %v303
      %v448 = vunpack.c.l.b16 %v304
      %v449 = vunpack.c.l.b16 %v305
      %v450 = vunpack.c.l.b16 %v306
      %v451 = vunpack.c.l.b16 %v307
      %v452 = vunpack.c.l.b16 %v308
      %v453 = vunpack.c.l.b16 %v309
      %v454 = vunpack.c.l.b16 %v310
      %v455 = vunpack.c.l.b16 %v311
      %v456 = vpack.c.b16 %v425, %v424
      %v457 = vpack.c.b16 %v427, %v426
      %v458 = vpack.c.b16 %v429, %v428
      %v459 = vpack.c.b16 %v431, %v430
      %v460 = vpack.c.b16 %v433, %v432
      %v461 = vpack.c.b16 %v435, %v434
      %v462 = vpack.c.b16 %v437, %v436
      %v463 = vpack.c.b16 %v439, %v438
      %v464 = vpack.c.b16 %v441, %v440
      %v465 = vpack.c.b16 %v443, %v442
      %v466 = vpack.c.b16 %v445, %v444
      %v467 = vpack.c.b16 %v447, %v446
      %v468 = vpack.c.b16 %v449, %v448
      %v469 = vpack.c.b16 %v451, %v450
      %v470 = vpack.c.b16 %v453, %v452
      %v471 = vpack.c.b16 %v455, %v454
      %488 = vmatprep.subr.bf16.mxu0 0
      %489 = vmatpush1.bf16.msra.mxu0 %v463
      %490 = vmatprep.subr.bf16.mxu0 0
      %491 = vmatpush1.bf16.msra.mxu0 %v462
      %492 = vmatprep.subr.bf16.mxu0 0
      %493 = vmatpush1.bf16.msra.mxu0 %v461
      %494 = vmatprep.subr.bf16.mxu0 0
      %495 = vmatpush1.bf16.msra.mxu0 %v460
      %496 = vmatprep.subr.bf16.mxu0 0
      %497 = vmatpush1.bf16.msra.mxu0 %v459
      %498 = vmatprep.subr.bf16.mxu0 0
      %499 = vmatpush1.bf16.msra.mxu0 %v458
      %500 = vmatprep.subr.bf16.mxu0 0
      %501 = vmatpush1.bf16.msra.mxu0 %v457
      %502 = vmatprep.subr.bf16.mxu0 0
      %503 = vmatpush1.bf16.msra.mxu0 %v456
      %504 = vmatprep.subr.bf16.mxu0 0
      %505 = vmatpush2.bf16.msra.mxu0 %v471
      %506 = vmatprep.subr.bf16.mxu0 0
      %507 = vmatpush2.bf16.msra.mxu0 %v470
      %508 = vmatprep.subr.bf16.mxu0 0
      %509 = vmatpush2.bf16.msra.mxu0 %v469
      %510 = vmatprep.subr.bf16.mxu0 0
      %511 = vmatpush2.bf16.msra.mxu0 %v468
      %512 = vmatprep.subr.bf16.mxu0 0
      %513 = vmatpush2.bf16.msra.mxu0 %v467
      %514 = vmatprep.subr.bf16.mxu0 0
      %515 = vmatpush2.bf16.msra.mxu0 %v466
      %516 = vmatprep.subr.bf16.mxu0 0
      %517 = vmatpush2.bf16.msra.mxu0 %v465
      %518 = vmatprep.subr.bf16.mxu0 0
      %519 = vmatpush2.bf16.msra.mxu0 %v464
      %520 = vmatprep.mubr.bf16.mxu0 %v361
      %521 = vmatmul.mubr.bf16.gmra.mxu0 %v360
      %v522 = vpop.f32.mrf.mxu0
      %v523 = vadd.f32 0.0, %v522
      %v524 = vpop.f32.mrf.mxu0
      %v525 = vpop.f32.mrf.mxu0
      %v526 = vadd.f32 0.0, %v525
      %v527 = vpop.f32.mrf.mxu0
      %528 = vmatprep.mubr.bf16.mxu0 %v363
      %529 = vmatmul.mubr.bf16.gmra.mxu0 %v362
      %v530 = vpop.f32.mrf.mxu0
      %v531 = vadd.f32 0.0, %v530
      %v532 = vpop.f32.mrf.mxu0
      %v533 = vpop.f32.mrf.mxu0
      %v534 = vadd.f32 0.0, %v533
      %v535 = vpop.f32.mrf.mxu0
      %536 = vmatprep.mubr.bf16.mxu0 %v365
      %537 = vmatmul.mubr.bf16.gmra.mxu0 %v364
      %v538 = vpop.f32.mrf.mxu0
      %v539 = vadd.f32 0.0, %v538
      %v540 = vpop.f32.mrf.mxu0
      %v541 = vpop.f32.mrf.mxu0
      %v542 = vadd.f32 0.0, %v541
      %v543 = vpop.f32.mrf.mxu0
      %544 = vmatprep.mubr.bf16.mxu0 %v367
      %545 = vmatmul.mubr.bf16.gmra.mxu0 %v366
      %v546 = vpop.f32.mrf.mxu0
      %v547 = vadd.f32 0.0, %v546
      %v548 = vpop.f32.mrf.mxu0
      %v549 = vpop.f32.mrf.mxu0
      %v550 = vadd.f32 0.0, %v549
      %v551 = vpop.f32.mrf.mxu0
      %552 = vmatprep.mubr.bf16.mxu0 %v369
      %553 = vmatmul.mubr.bf16.gmra.mxu0 %v368
      %v554 = vpop.f32.mrf.mxu0
      %v555 = vadd.f32 0.0, %v554
      %v556 = vpop.f32.mrf.mxu0
      %v557 = vpop.f32.mrf.mxu0
      %v558 = vadd.f32 0.0, %v557
      %v559 = vpop.f32.mrf.mxu0
      %560 = vmatprep.mubr.bf16.mxu0 %v371
      %561 = vmatmul.mubr.bf16.gmra.mxu0 %v370
      %v562 = vpop.f32.mrf.mxu0
      %v563 = vadd.f32 0.0, %v562
      %v564 = vpop.f32.mrf.mxu0
      %v565 = vpop.f32.mrf.mxu0
      %v566 = vadd.f32 0.0, %v565
      %v567 = vpop.f32.mrf.mxu0
      %568 = vmatprep.mubr.bf16.mxu0 %v373
      %569 = vmatmul.mubr.bf16.gmra.mxu0 %v372
      %v570 = vpop.f32.mrf.mxu0
      %v571 = vadd.f32 0.0, %v570
      %v572 = vpop.f32.mrf.mxu0
      %v573 = vpop.f32.mrf.mxu0
      %v574 = vadd.f32 0.0, %v573
      %v575 = vpop.f32.mrf.mxu0
      %576 = vmatprep.mubr.bf16.mxu0 %v375
      %577 = vmatmul.mubr.bf16.gmra.mxu0 %v374
      %v578 = vpop.f32.mrf.mxu0
      %v579 = vadd.f32 0.0, %v578
      %v580 = vpop.f32.mrf.mxu0
      %v581 = vpop.f32.mrf.mxu0
      %v582 = vadd.f32 0.0, %v581
      %v583 = vpop.f32.mrf.mxu0
      %584 = vdwg.mxu0
      %v585 = vadd.f32 %v248, %v523
      %v586 = vadd.f32 %v249, %v526
      %v587 = vadd.f32 %v250, %v531
      %v588 = vadd.f32 %v251, %v534
      %v589 = vadd.f32 %v252, %v539
      %v590 = vadd.f32 %v253, %v542
      %v591 = vadd.f32 %v254, %v547
      %v592 = vadd.f32 %v255, %v550
      %v593 = vadd.f32 %v256, %v555
      %v594 = vadd.f32 %v257, %v558
      %v595 = vadd.f32 %v258, %v563
      %v596 = vadd.f32 %v259, %v566
      %v597 = vadd.f32 %v260, %v571
      %v598 = vadd.f32 %v261, %v574
      %v599 = vadd.f32 %v262, %v579
      %v600 = vadd.f32 %v263, %v582
      %601 = vst [vmem:[#allocation2] sm:$0xff] %v585
      %602 = vst [vmem:[#allocation2 + $0x8] sm:$0xff] %v586
      %603 = vst [vmem:[#allocation2 + $0x10] sm:$0xff] %v587
      %604 = vst [vmem:[#allocation2 + $0x18] sm:$0xff] %v588
      %605 = vst [vmem:[#allocation2 + $0x20] sm:$0xff] %v589
      %606 = vst [vmem:[#allocation2 + $0x28] sm:$0xff] %v590
      %607 = vst [vmem:[#allocation2 + $0x30] sm:$0xff] %v591
      %608 = vst [vmem:[#allocation2 + $0x38] sm:$0xff] %v592
      %609 = vst [vmem:[#allocation2 + $0x40] sm:$0xff] %v593
      %610 = vst [vmem:[#allocation2 + $0x48] sm:$0xff] %v594
      %611 = vst [vmem:[#allocation2 + $0x50] sm:$0xff] %v595
      %612 = vst [vmem:[#allocation2 + $0x58] sm:$0xff] %v596
      %613 = vst [vmem:[#allocation2 + $0x60] sm:$0xff] %v597
      %614 = vst [vmem:[#allocation2 + $0x68] sm:$0xff] %v598
      %615 = vst [vmem:[#allocation2 + $0x70] sm:$0xff] %v599
      %616 = vst [vmem:[#allocation2 + $0x78] sm:$0xff] %v600
      // Predicated region
      $region37: #{label_svdd_forward.2} parent=31 // pred_check
        %p617 = pneg %p228
      $region38: #{label_svdd_forward.2} parent=31 // pred_check_branch
        %619 = sbr.rel (%p617) target = $region40
      $region39: #{label_svdd_forward.2} parent=31 // pred_region
        %v620 = vld [vmem:[#allocation2] sm:$0xff]
        %v621 = vld [vmem:[#allocation2 + $0x8] sm:$0xff]
        %v622 = vld [vmem:[#allocation2 + $0x10] sm:$0xff]
        %v623 = vld [vmem:[#allocation2 + $0x18] sm:$0xff]
        %v624 = vld [vmem:[#allocation2 + $0x20] sm:$0xff]
        %v625 = vld [vmem:[#allocation2 + $0x28] sm:$0xff]
        %v626 = vld [vmem:[#allocation2 + $0x30] sm:$0xff]
        %v627 = vld [vmem:[#allocation2 + $0x38] sm:$0xff]
        %v628 = vld [vmem:[#allocation2 + $0x40] sm:$0xff]
        %v629 = vld [vmem:[#allocation2 + $0x48] sm:$0xff]
        %v630 = vld [vmem:[#allocation2 + $0x50] sm:$0xff]
        %v631 = vld [vmem:[#allocation2 + $0x58] sm:$0xff]
        %v632 = vld [vmem:[#allocation2 + $0x60] sm:$0xff]
        %v633 = vld [vmem:[#allocation2 + $0x68] sm:$0xff]
        %v634 = vld [vmem:[#allocation2 + $0x70] sm:$0xff]
        %v635 = vld [vmem:[#allocation2 + $0x78] sm:$0xff]
        %v636 = vld [vmem:[%s2] sm:$0x1]
        %v638 = vlaneseq
        %v639 = vshrl.u32 %v638, 7
        %v640 = vsub.s32 0, %v639
        %v641 = vrot.slane %v636, %v640
        %v643 = vadd.f32 %v620, %v641
        %v644 = vadd.f32 %v621, %v641
        %v645 = vadd.f32 %v622, %v641
        %v646 = vadd.f32 %v623, %v641
        %v647 = vadd.f32 %v624, %v641
        %v648 = vadd.f32 %v625, %v641
        %v649 = vadd.f32 %v626, %v641
        %v650 = vadd.f32 %v627, %v641
        %v651 = vadd.f32 %v628, %v641
        %v652 = vadd.f32 %v629, %v641
        %v653 = vadd.f32 %v630, %v641
        %v654 = vadd.f32 %v631, %v641
        %v655 = vadd.f32 %v632, %v641
        %v656 = vadd.f32 %v633, %v641
        %v657 = vadd.f32 %v634, %v641
        %v658 = vadd.f32 %v635, %v641
        %v659 = vpack.c.bf16 %v644, %v643
        %v660 = vpack.c.bf16 %v646, %v645
        %v661 = vpack.c.bf16 %v648, %v647
        %v662 = vpack.c.bf16 %v650, %v649
        %v663 = vpack.c.bf16 %v652, %v651
        %v664 = vpack.c.bf16 %v654, %v653
        %v665 = vpack.c.bf16 %v656, %v655
        %v666 = vpack.c.bf16 %v658, %v657
        %v675 = vunpack.c.l.b16 %v659
        %v676 = vunpack.c.h.b16 %v659
        %v677 = vunpack.c.l.b16 %v660
        %v678 = vunpack.c.h.b16 %v660
        %v679 = vunpack.c.l.b16 %v661
        %v680 = vunpack.c.h.b16 %v661
        %v681 = vunpack.c.l.b16 %v662
        %v682 = vunpack.c.h.b16 %v662
        %v683 = vunpack.c.l.b16 %v663
        %v684 = vunpack.c.h.b16 %v663
        %v685 = vunpack.c.l.b16 %v664
        %v686 = vunpack.c.h.b16 %v664
        %v687 = vunpack.c.l.b16 %v665
        %v688 = vunpack.c.h.b16 %v665
        %v689 = vunpack.c.l.b16 %v666
        %v690 = vunpack.c.h.b16 %v666
        %v691 = vpack.c.b16 %v675, %v675
        %v692 = vpack.c.b16 %v676, %v676
        %v693 = vpack.c.b16 %v677, %v677
        %v694 = vpack.c.b16 %v678, %v678
        %v695 = vpack.c.b16 %v679, %v679
        %v696 = vpack.c.b16 %v680, %v680
        %v697 = vpack.c.b16 %v681, %v681
        %v698 = vpack.c.b16 %v682, %v682
        %v699 = vpack.c.b16 %v683, %v683
        %v700 = vpack.c.b16 %v684, %v684
        %v701 = vpack.c.b16 %v685, %v685
        %v702 = vpack.c.b16 %v686, %v686
        %v703 = vpack.c.b16 %v687, %v687
        %v704 = vpack.c.b16 %v688, %v688
        %v705 = vpack.c.b16 %v689, %v689
        %v706 = vpack.c.b16 %v690, %v690
        %723 = vst [vmem:[%s225] sm:$0xf] %v691
        %724 = vst [vmem:[%s225 + $0x4] sm:$0xf] %v692
        %725 = vst [vmem:[%s225 + $0x8] sm:$0xf] %v693
        %726 = vst [vmem:[%s225 + $0xc] sm:$0xf] %v694
        %727 = vst [vmem:[%s225 + $0x10] sm:$0xf] %v695
        %728 = vst [vmem:[%s225 + $0x14] sm:$0xf] %v696
        %729 = vst [vmem:[%s225 + $0x18] sm:$0xf] %v697
        %730 = vst [vmem:[%s225 + $0x1c] sm:$0xf] %v698
        %731 = vst [vmem:[%s225 + $0x20] sm:$0xf] %v699
        %732 = vst [vmem:[%s225 + $0x24] sm:$0xf] %v700
        %733 = vst [vmem:[%s225 + $0x28] sm:$0xf] %v701
        %734 = vst [vmem:[%s225 + $0x2c] sm:$0xf] %v702
        %735 = vst [vmem:[%s225 + $0x30] sm:$0xf] %v703
        %736 = vst [vmem:[%s225 + $0x34] sm:$0xf] %v704
        %737 = vst [vmem:[%s225 + $0x38] sm:$0xf] %v705
        %738 = vst [vmem:[%s225 + $0x3c] sm:$0xf] %v706
      $region40: #{label_svdd_forward.2} parent=31 // pred_fallthru
        _
      %s739 = smul.u32 16, %s18
      %p740 = scmp.lt.s32.totalorder %s739, 31
      %s741 = scalar_select %p740, %s739, 31
      %s742 = smul.addr %s741, 4
      %s743 = scalar_lea.vmem %s3, %s742
      // Predicated region
      $region41: #{label_svdd_forward.2} parent=31 // pred_check
        %p744 = pneg %p119
      $region42: #{label_svdd_forward.2} parent=31 // pred_check_branch
        %746 = sbr.rel (%p744) target = $region44
      $region43: #{label_svdd_forward.2} parent=31 // pred_region
        %s747 = smul.u32 16, %s18
      $region44: #{label_svdd_forward.2} parent=31 // pred_fallthru
        _
    $region32: #{label_svdd_forward.2} parent=5 // pred_fallthru
      _
    %p748 = scmp.le.s32.totalorder 2, %s9
    // Predicated region
    $region45: #{label_svdd_forward.2} parent=5 // pred_check
      %p749 = pneg %p748
    $region46: #{label_svdd_forward.2} parent=5 // pred_check_branch
      %751 = sbr.rel (%p749) target = $region48
    $region47: #{label_svdd_forward.2} parent=5 // pred_region
      %s752 = ssub.s32 %s9, 2
      // Predicated region
      $region49: #{label_svdd_forward.2} parent=47 // pred_check
        %p753 = pneg %p125
      $region50: #{label_svdd_forward.2} parent=47 // pred_check_branch
        %755 = sbr.rel (%p753) target = $region52
      $region51: #{label_svdd_forward.2} parent=47 // pred_region
        %s756 = smul.u32 16, %s20
        %p757 = scmp.lt.s32.totalorder %s756, 31
        %s758 = scalar_select %p757, %s756, 31
        %s759 = smul.addr %s758, 4
        %s760 = scalar_lea.vmem %s3, %s759
      $region52: #{label_svdd_forward.2} parent=47 // pred_fallthru
        _
    $region48: #{label_svdd_forward.2} parent=5 // pred_fallthru
      _
  $region6: #{label_svdd_forward.2} parent=0 // loop_footer
    %s13 = sadd.s32 1, %s9
  $region7: #{label_svdd_forward.2} parent=0 // loop_footer_branch
    %8 = sbr.rel target = $region3
  $region8: #{label_svdd_forward.2} parent=0 // loop_exit
    _

</llo_original>
